<compile_context>
chip_gen: v7x
topology: tpu7x:2x2x1
jax: 0.10.0
libtpu: 0.0.40
codegen_flags: <defaults>
</compile_context>

<pallas_src>
import functools

import jax
import jax.numpy as jnp
from jax.experimental import pallas as pl
from jax.experimental.pallas import tpu as pltpu

LANE = 128  # pad hidden widths to multiples of the vreg lane count


def _round_up(n, m):
    return ((n + m - 1) // m) * m


def _make_fc_softmax_kernel(n_hidden):
    """Build the fused kernel for `n_hidden` (Linear+ReLU) layers + final Linear + softmax."""

    def kernel(*refs):
        x_ref, o_ref = refs[0], refs[-1]
        wb_refs = refs[1:-1]                       # [w0, b0, w1, b1, ..., w_out, b_out]

        # Cast streamed f32 rows to bf16 in-kernel (MXU-native; avoids a wrapper cast pass).
        h = x_ref[...].astype(jnp.bfloat16)

        for l in range(n_hidden):                  # hidden layers: Linear + ReLU
            w_ref, b_ref = wb_refs[2 * l], wb_refs[2 * l + 1]
            h = jnp.dot(h, w_ref[...], preferred_element_type=jnp.float32) + b_ref[...]
            h = jnp.maximum(h, 0.0).astype(jnp.bfloat16)

        # Output layer (no activation). Width is NOT padded -> logits are exactly the real
        # classes and the softmax below needs no masking tricks.
        w_ref, b_ref = wb_refs[-2], wb_refs[-1]
        logits = jnp.dot(h, w_ref[...], preferred_element_type=jnp.float32) + b_ref[...]

        # Numerically stable softmax over the last dim, exact normalization.
        m = jnp.max(logits, axis=-1, keepdims=True)
        e = jnp.exp(logits - m)
        s = jnp.sum(e, axis=-1, keepdims=True)
        o_ref[...] = (e / s).astype(o_ref.dtype)

    return kernel


def prepare_params(params):
    """Pad hidden widths to multiples of 128 and cast weights to bf16 — run ONCE at init,
    off the per-call hot path. Padded hidden units get zero weights/bias so they carry
    exactly zero activation; the final layer's output width is left unpadded."""
    n_layers = len(params)
    prepared = []
    prev_pad = params[0][0].shape[0]               # input dim: not padded
    for idx, (w, b) in enumerate(params):
        in_dim, out_dim = w.shape
        out_pad = out_dim if idx == n_layers - 1 else _round_up(out_dim, LANE)
        wp = jnp.zeros((prev_pad, out_pad), jnp.float32).at[:in_dim, :out_dim].set(w)
        bp = jnp.zeros((1, out_pad), jnp.float32).at[:, :out_dim].set(b.reshape(1, -1))
        prepared.append((wp.astype(jnp.bfloat16), bp))
        prev_pad = out_pad
    return tuple(prepared)


@functools.partial(jax.jit, static_argnames=("max_tile_m",))
def fc_model_forward(x, prepared_params, *, max_tile_m=1024):
    """Fused FcModel forward.

    x: (batch, input_size) f32.
    prepared_params: output of prepare_params().
    Returns softmax probabilities, shape (batch, output_size), f32.
    """
    batch, in_dim = x.shape
    out_dim = prepared_params[-1][0].shape[1]
    n_hidden = len(prepared_params) - 1

    # Row tiling: target 2 large grid steps (even -> both v7x TensorCores get work) when
    # the batch is big enough, otherwise a single step. Per-grid-step overhead (~0.35 us)
    # dwarfs the per-tile compute at these sizes, so fewer, bigger tiles win.
    if batch >= 256:
        tm = min(max_tile_m, _round_up(pl.cdiv(batch, 2), 16))
    else:
        tm = _round_up(max(batch, 8), 16)
    padded_batch = _round_up(batch, tm)
    grid_m = padded_batch // tm

    xp = x.astype(jnp.float32)
    if padded_batch != batch:
        xp = jnp.pad(xp, ((0, padded_batch - batch), (0, 0)))

    def resident(arr):                             # weights/biases: same block every step
        return pl.BlockSpec(arr.shape, lambda i: (0, 0))

    in_specs = [pl.BlockSpec((tm, in_dim), lambda i: (i, 0))]   # x rows: streamed per tile
    flat_wb = []
    for w, b in prepared_params:
        in_specs += [resident(w), resident(b)]
        flat_wb += [w, b]

    flops = sum(2 * padded_batch * w.shape[0] * w.shape[1] for w, _ in prepared_params)
    bytes_accessed = (xp.size * 4 + padded_batch * out_dim * 4
                      + sum(w.size * 2 + b.size * 4 for w, b in prepared_params))
    cost = pl.CostEstimate(flops=flops,
                           transcendentals=padded_batch * out_dim,
                           bytes_accessed=bytes_accessed)

    out = pl.pallas_call(
        _make_fc_softmax_kernel(n_hidden),
        out_shape=jax.ShapeDtypeStruct((padded_batch, out_dim), jnp.float32),
        grid=(grid_m,),
        in_specs=in_specs,
        out_specs=pl.BlockSpec((tm, out_dim), lambda i: (i, 0)),
        compiler_params=pltpu.CompilerParams(
            dimension_semantics=("parallel",),     # megacore sharding on v7x
        ),
        cost_estimate=cost,
    )(xp, *flat_wb)

    if padded_batch != batch:                      # no-op for the benchmark shapes
        out = out[:batch]
    return out


def init_params(key, input_size, hidden_dims, output_size):
    """Deterministic synthetic parameter init (shapes match the PyTorch module)."""
    dims = [input_size] + list(hidden_dims) + [output_size]
    params = []
    for i in range(len(dims) - 1):
        key, kw, kb = jax.random.split(key, 3)
        bound = 1.0 / jnp.sqrt(dims[i])
        # Stored as (in_dim, out_dim) == transpose of PyTorch's (out, in) weight.
        w = jax.random.uniform(kw, (dims[i], dims[i + 1]), jnp.float32, -bound, bound)
        b = jax.random.uniform(kb, (1, dims[i + 1]), jnp.float32, -bound, bound)
        params.append((w, b))
    return params


def reference_forward(x, params):
    """Plain-JAX reference with the same bf16-matmul / f32-elementwise recipe."""
    h = x.astype(jnp.bfloat16)
    for w, b in params[:-1]:
        h = jnp.dot(h, w.astype(jnp.bfloat16), preferred_element_type=jnp.float32) + b
        h = jnp.maximum(h, 0.0).astype(jnp.bfloat16)
    w, b = params[-1]
    logits = jnp.dot(h, w.astype(jnp.bfloat16), preferred_element_type=jnp.float32) + b
    return jax.nn.softmax(logits, axis=-1)


if __name__ == "__main__":
    # Shapes consistent with the module: numLayers=2, hiddenDimArr=[64, 64].
    batch, input_size, output_size = 512, 32, 16
    hidden_dims = [64, 64]

    key = jax.random.PRNGKey(0)
    key, kx = jax.random.split(key)
    x = jax.random.normal(kx, (batch, input_size), jnp.float32)
    params = init_params(key, input_size, hidden_dims, output_size)

    prepared = prepare_params(params)              # pad + bf16-cast once, off the hot path
    out = fc_model_forward(x, prepared)            # grid of 2 row-tiles (256 rows each)
    out = jax.block_until_ready(out)

    ref = reference_forward(x, params)
    assert out.shape == (batch, output_size)
    assert bool(jnp.allclose(jnp.sum(out, axis=-1), 1.0, atol=1e-3)), "softmax rows must sum to 1"
    assert bool(jnp.allclose(out, ref, atol=2e-3, rtol=2e-3)), "mismatch vs JAX reference"

    print("KERNEL_OK")
</pallas_src>

<mosaic_0001>
module attributes {stable_mosaic.version = 11 : i64} {
  func.func @kernel(%arg0: i32, %arg1: memref<256x32xf32, #tpu.memory_space<vmem>>, %arg2: memref<32x128xbf16, #tpu.memory_space<vmem>>, %arg3: memref<1x128xf32, #tpu.memory_space<vmem>>, %arg4: memref<128x128xbf16, #tpu.memory_space<vmem>>, %arg5: memref<1x128xf32, #tpu.memory_space<vmem>>, %arg6: memref<128x16xbf16, #tpu.memory_space<vmem>>, %arg7: memref<1x16xf32, #tpu.memory_space<vmem>>, %arg8: memref<256x16xf32, #tpu.memory_space<vmem>>) attributes {dimension_semantics = [#tpu.dimension_semantics<parallel>], iteration_bounds = array<i64: 2>, scalar_prefetch = 0 : i64, scratch_operands = 0 : i64, tpu.core_type = #tpu.core_type<tc>, window_params = [{transform_indices = @transform_0, window_bounds = array<i64: 256, 32>}, {pipeline_mode = #tpu.pipeline_mode<synchronous>, transform_indices = @transform_1, window_bounds = array<i64: 32, 128>}, {pipeline_mode = #tpu.pipeline_mode<synchronous>, transform_indices = @transform_2, window_bounds = array<i64: 1, 128>}, {pipeline_mode = #tpu.pipeline_mode<synchronous>, transform_indices = @transform_3, window_bounds = array<i64: 128, 128>}, {pipeline_mode = #tpu.pipeline_mode<synchronous>, transform_indices = @transform_4, window_bounds = array<i64: 1, 128>}, {pipeline_mode = #tpu.pipeline_mode<synchronous>, transform_indices = @transform_5, window_bounds = array<i64: 128, 16>}, {pipeline_mode = #tpu.pipeline_mode<synchronous>, transform_indices = @transform_6, window_bounds = array<i64: 1, 16>}, {transform_indices = @transform_7, window_bounds = array<i64: 256, 16>}]} {
    %c0 = arith.constant 0 : index
    %c0_0 = arith.constant 0 : index
    %0 = vector.load %arg1[%c0, %c0_0] : memref<256x32xf32, #tpu.memory_space<vmem>>, vector<256x32xf32>
    %1 = arith.truncf %0 : vector<256x32xf32> to vector<256x32xbf16>
    %c0_1 = arith.constant 0 : index
    %c0_2 = arith.constant 0 : index
    %2 = vector.load %arg2[%c0_1, %c0_2] : memref<32x128xbf16, #tpu.memory_space<vmem>>, vector<32x128xbf16>
    %cst = arith.constant dense<0.000000e+00> : vector<256x128xf32>
    %3 = tpu.matmul %1, %2, %cst {dimension_numbers = #tpu.dot_dimension_numbers<[1], [0], [0], [1], [0, 0, 1, 1], [], []>} : vector<256x32xbf16>, vector<32x128xbf16>, vector<256x128xf32> -> vector<256x128xf32>
    %c0_3 = arith.constant 0 : index
    %c0_4 = arith.constant 0 : index
    %4 = vector.load %arg3[%c0_3, %c0_4] : memref<1x128xf32, #tpu.memory_space<vmem>>, vector<1x128xf32>
    %5 = vector.broadcast %4 : vector<1x128xf32> to vector<256x128xf32>
    %6 = arith.addf %3, %5 : vector<256x128xf32>
    %cst_5 = arith.constant 0.000000e+00 : f32
    %7 = vector.broadcast %cst_5 : f32 to vector<256x128xf32>
    %8 = arith.maximumf %6, %7 : vector<256x128xf32>
    %9 = arith.truncf %8 : vector<256x128xf32> to vector<256x128xbf16>
    %c0_6 = arith.constant 0 : index
    %c0_7 = arith.constant 0 : index
    %10 = vector.load %arg4[%c0_6, %c0_7] : memref<128x128xbf16, #tpu.memory_space<vmem>>, vector<128x128xbf16>
    %cst_8 = arith.constant dense<0.000000e+00> : vector<256x128xf32>
    %11 = tpu.matmul %9, %10, %cst_8 {dimension_numbers = #tpu.dot_dimension_numbers<[1], [0], [0], [1], [0, 0, 1, 1], [], []>} : vector<256x128xbf16>, vector<128x128xbf16>, vector<256x128xf32> -> vector<256x128xf32>
    %c0_9 = arith.constant 0 : index
    %c0_10 = arith.constant 0 : index
    %12 = vector.load %arg5[%c0_9, %c0_10] : memref<1x128xf32, #tpu.memory_space<vmem>>, vector<1x128xf32>
    %13 = vector.broadcast %12 : vector<1x128xf32> to vector<256x128xf32>
    %14 = arith.addf %11, %13 : vector<256x128xf32>
    %cst_11 = arith.constant 0.000000e+00 : f32
    %15 = vector.broadcast %cst_11 : f32 to vector<256x128xf32>
    %16 = arith.maximumf %14, %15 : vector<256x128xf32>
    %17 = arith.truncf %16 : vector<256x128xf32> to vector<256x128xbf16>
    %c0_12 = arith.constant 0 : index
    %c0_13 = arith.constant 0 : index
    %18 = vector.load %arg6[%c0_12, %c0_13] : memref<128x16xbf16, #tpu.memory_space<vmem>>, vector<128x16xbf16>
    %cst_14 = arith.constant dense<0.000000e+00> : vector<256x16xf32>
    %19 = tpu.matmul %17, %18, %cst_14 {dimension_numbers = #tpu.dot_dimension_numbers<[1], [0], [0], [1], [0, 0, 1, 1], [], []>} : vector<256x128xbf16>, vector<128x16xbf16>, vector<256x16xf32> -> vector<256x16xf32>
    %c0_15 = arith.constant 0 : index
    %c0_16 = arith.constant 0 : index
    %20 = vector.load %arg7[%c0_15, %c0_16] : memref<1x16xf32, #tpu.memory_space<vmem>>, vector<1x16xf32>
    %21 = vector.broadcast %20 : vector<1x16xf32> to vector<256x16xf32>
    %22 = arith.addf %19, %21 : vector<256x16xf32>
    %cst_17 = arith.constant dense<0xFF800000> : vector<256xf32>
    %23 = vector.multi_reduction <maximumf>, %22, %cst_17 [1] : vector<256x16xf32> to vector<256xf32>
    %24 = vector.shape_cast %23 : vector<256xf32> to vector<256x1xf32>
    %25 = vector.broadcast %24 : vector<256x1xf32> to vector<256x16xf32>
    %26 = arith.subf %22, %25 : vector<256x16xf32>
    %27 = math.exp %26 : vector<256x16xf32>
    %cst_18 = arith.constant dense<0.000000e+00> : vector<256xf32>
    %28 = vector.multi_reduction <add>, %27, %cst_18 [1] : vector<256x16xf32> to vector<256xf32>
    %29 = vector.shape_cast %28 : vector<256xf32> to vector<256x1xf32>
    %30 = vector.broadcast %29 : vector<256x1xf32> to vector<256x16xf32>
    %31 = arith.divf %27, %30 : vector<256x16xf32>
    %c0_19 = arith.constant 0 : index
    %c0_20 = arith.constant 0 : index
    %32 = vector.load %arg8[%c0_19, %c0_20] : memref<256x16xf32, #tpu.memory_space<vmem>>, vector<256x16xf32>
    tpu.vector_store %arg8[%c0_19, %c0_20], %31 {strides = array<i32>} : memref<256x16xf32, #tpu.memory_space<vmem>>, vector<256x16xf32>,
    return
  }
  func.func @transform_0(%arg0: i32) -> (i32, i32) {
    %c0_i32 = arith.constant 0 : i32
    %c0_i32_0 = arith.constant 0 : i32
    return %arg0, %c0_i32 : i32, i32
  }
  func.func @transform_1(%arg0: i32) -> (i32, i32) {
    %c0_i32 = arith.constant 0 : i32
    %c0_i32_0 = arith.constant 0 : i32
    %c0_i32_1 = arith.constant 0 : i32
    return %c0_i32, %c0_i32_0 : i32, i32
  }
  func.func @transform_2(%arg0: i32) -> (i32, i32) {
    %c0_i32 = arith.constant 0 : i32
    %c0_i32_0 = arith.constant 0 : i32
    %c0_i32_1 = arith.constant 0 : i32
    return %c0_i32, %c0_i32_0 : i32, i32
  }
  func.func @transform_3(%arg0: i32) -> (i32, i32) {
    %c0_i32 = arith.constant 0 : i32
    %c0_i32_0 = arith.constant 0 : i32
    %c0_i32_1 = arith.constant 0 : i32
    return %c0_i32, %c0_i32_0 : i32, i32
  }
  func.func @transform_4(%arg0: i32) -> (i32, i32) {
    %c0_i32 = arith.constant 0 : i32
    %c0_i32_0 = arith.constant 0 : i32
    %c0_i32_1 = arith.constant 0 : i32
    return %c0_i32, %c0_i32_0 : i32, i32
  }
  func.func @transform_5(%arg0: i32) -> (i32, i32) {
    %c0_i32 = arith.constant 0 : i32
    %c0_i32_0 = arith.constant 0 : i32
    %c0_i32_1 = arith.constant 0 : i32
    return %c0_i32, %c0_i32_0 : i32, i32
  }
  func.func @transform_6(%arg0: i32) -> (i32, i32) {
    %c0_i32 = arith.constant 0 : i32
    %c0_i32_0 = arith.constant 0 : i32
    %c0_i32_1 = arith.constant 0 : i32
    return %c0_i32, %c0_i32_0 : i32, i32
  }
  func.func @transform_7(%arg0: i32) -> (i32, i32) {
    %c0_i32 = arith.constant 0 : i32
    %c0_i32_0 = arith.constant 0 : i32
    return %arg0, %c0_i32 : i32, i32
  }
}

</mosaic_0001>

<llo_original>
// kernel: fc_model_forward.1
$region0: #{fc_model_forward.1}
  #allocation0 [shape = 'u32[]', space=smem, size = 0x4, offset = 0x4, fixed_abs, tag = 'smem constant byte address 0x4 - core index']
  #allocation1 [shape = 'u32[144,128]{1,0:T(1,128)}', space=vmem, size = 0x12000, scoped, tag = 'internal scratch']
  %s0 = inlined_call_operand.vmem [shape: f32[512,32], index: 0, kind: input, shape index: {}]
  %s1 = inlined_call_operand.vmem [shape: bf16[32,128], index: 1, kind: input, shape index: {}]
  %s2 = inlined_call_operand.vmem [shape: f32[1,128], index: 2, kind: input, shape index: {}]
  %s3 = inlined_call_operand.vmem [shape: bf16[128,128], index: 3, kind: input, shape index: {}]
  %s4 = inlined_call_operand.vmem [shape: f32[1,128], index: 4, kind: input, shape index: {}]
  %s5 = inlined_call_operand.vmem [shape: bf16[128,16], index: 5, kind: input, shape index: {}]
  %s6 = inlined_call_operand.vmem [shape: f32[1,16], index: 6, kind: input, shape index: {}]
  %s7 = inlined_call_operand.vmem [shape: f32[512,16], index: 7, kind: output, shape index: {}]
  %s8 = sld [smem:[#allocation0]]
  $region61: #{fc_model_forward.1} parent=0
    _
  %s10 = ssub.s32 1, %s8
  %s11 = scalar_select 0, %s10, %s8
  loop: start=0, step=1, limit=4
  $region2: #{fc_model_forward.1} parent=0 // loop_pre_header
    _
  $region3: #{fc_model_forward.1} parent=0 // loop_header
    %s13 = sphi 0, %s17
    %p14 = scmp.ge.s32.totalorder %s13, 4
    %s23 = sphi 0, %s25
    %s26 = sphi 0, %s23
    %s27 = sphi 0, %s26
    %s43 = sphi 0, %s27
    %s47 = sphi 0, %s47
    %s49 = sphi 0, %s47
    %s50 = sphi 0, %s49
    %s64 = sphi 0, %s50
    %s68 = sphi 0, %s68
    %s70 = sphi 0, %s68
    %s71 = sphi 0, %s70
    %s85 = sphi 0, %s71
    %s89 = sphi 0, %s89
    %s91 = sphi 0, %s89
    %s92 = sphi 0, %s91
    %s106 = sphi 0, %s92
    %s110 = sphi 0, %s110
    %s112 = sphi 0, %s110
    %s113 = sphi 0, %s112
    %s127 = sphi 0, %s113
    %s131 = sphi 0, %s131
    %s133 = sphi 0, %s131
    %s134 = sphi 0, %s133
    %s148 = sphi 0, %s134
    %s152 = sphi 0, %s152
    %s154 = sphi 0, %s152
    %s155 = sphi 0, %s154
    %s169 = sphi 0, %s155
    %s175 = sphi 0, %s177
    %s178 = sphi 0, %s175
    %s179 = sphi 0, %s178
    %s195 = sphi 0, %s179
  $region4: #{fc_model_forward.1} parent=0 // loop_header_branch
    %16 = sbr.rel (%p14) target = $region8
  $region5: #{fc_model_forward.1} parent=0 // loop_body
    %s18 = ssub.s32 %s13, 1
    %s19 = ssub.s32 %s13, 2
    %s20 = sadd.s32 %s13, 1
    %s21 = ssub.s32 %s13, %s20
    %p22 = scmp.eq.s32.totalorder %s21, 0
    %s24 = sadd.s32 %s23, 1
    %s25 = scalar_select %p22, %s23, %s24
    %p28 = pneg %p22
    %p29 = scmp.eq.s32.totalorder %s13, 1
    %p30 = por %p28, %p29
    %p31 = scmp.ne.s32.totalorder %s23, %s26
    %p32 = scmp.eq.s32.totalorder %s13, 0
    %p33 = por %p31, %p32
    %p34 = scmp.ne.s32.totalorder %s23, %s26
    %p35 = scmp.eq.s32.totalorder %s18, 1
    %p36 = por %p34, %p35
    %p37 = scmp.ne.s32.totalorder %s26, %s27
    %p38 = scmp.eq.s32.totalorder %s18, 0
    %p39 = por %p37, %p38
    %p40 = scmp.ne.s32.totalorder %s26, %s27
    %p41 = scmp.eq.s32.totalorder %s19, 1
    %p42 = por %p40, %p41
    %p44 = scmp.ne.s32.totalorder %s27, %s43
    %p45 = scmp.eq.s32.totalorder %s19, 0
    %p46 = por %p44, %p45
    %s48 = sadd.s32 %s47, 1
    %p51 = scmp.eq.s32.totalorder %s13, 1
    %p52 = scmp.ne.s32.totalorder %s47, %s49
    %p53 = scmp.eq.s32.totalorder %s13, 0
    %p54 = por %p52, %p53
    %p55 = scmp.ne.s32.totalorder %s47, %s49
    %p56 = scmp.eq.s32.totalorder %s18, 1
    %p57 = por %p55, %p56
    %p58 = scmp.ne.s32.totalorder %s49, %s50
    %p59 = scmp.eq.s32.totalorder %s18, 0
    %p60 = por %p58, %p59
    %p61 = scmp.ne.s32.totalorder %s49, %s50
    %p62 = scmp.eq.s32.totalorder %s19, 1
    %p63 = por %p61, %p62
    %p65 = scmp.ne.s32.totalorder %s50, %s64
    %p66 = scmp.eq.s32.totalorder %s19, 0
    %p67 = por %p65, %p66
    %s69 = sadd.s32 %s68, 1
    %p72 = scmp.eq.s32.totalorder %s13, 1
    %p73 = scmp.ne.s32.totalorder %s68, %s70
    %p74 = scmp.eq.s32.totalorder %s13, 0
    %p75 = por %p73, %p74
    %p76 = scmp.ne.s32.totalorder %s68, %s70
    %p77 = scmp.eq.s32.totalorder %s18, 1
    %p78 = por %p76, %p77
    %p79 = scmp.ne.s32.totalorder %s70, %s71
    %p80 = scmp.eq.s32.totalorder %s18, 0
    %p81 = por %p79, %p80
    %p82 = scmp.ne.s32.totalorder %s70, %s71
    %p83 = scmp.eq.s32.totalorder %s19, 1
    %p84 = por %p82, %p83
    %p86 = scmp.ne.s32.totalorder %s71, %s85
    %p87 = scmp.eq.s32.totalorder %s19, 0
    %p88 = por %p86, %p87
    %s90 = sadd.s32 %s89, 1
    %p93 = scmp.eq.s32.totalorder %s13, 1
    %p94 = scmp.ne.s32.totalorder %s89, %s91
    %p95 = scmp.eq.s32.totalorder %s13, 0
    %p96 = por %p94, %p95
    %p97 = scmp.ne.s32.totalorder %s89, %s91
    %p98 = scmp.eq.s32.totalorder %s18, 1
    %p99 = por %p97, %p98
    %p100 = scmp.ne.s32.totalorder %s91, %s92
    %p101 = scmp.eq.s32.totalorder %s18, 0
    %p102 = por %p100, %p101
    %p103 = scmp.ne.s32.totalorder %s91, %s92
    %p104 = scmp.eq.s32.totalorder %s19, 1
    %p105 = por %p103, %p104
    %p107 = scmp.ne.s32.totalorder %s92, %s106
    %p108 = scmp.eq.s32.totalorder %s19, 0
    %p109 = por %p107, %p108
    %s111 = sadd.s32 %s110, 1
    %p114 = scmp.eq.s32.totalorder %s13, 1
    %p115 = scmp.ne.s32.totalorder %s110, %s112
    %p116 = scmp.eq.s32.totalorder %s13, 0
    %p117 = por %p115, %p116
    %p118 = scmp.ne.s32.totalorder %s110, %s112
    %p119 = scmp.eq.s32.totalorder %s18, 1
    %p120 = por %p118, %p119
    %p121 = scmp.ne.s32.totalorder %s112, %s113
    %p122 = scmp.eq.s32.totalorder %s18, 0
    %p123 = por %p121, %p122
    %p124 = scmp.ne.s32.totalorder %s112, %s113
    %p125 = scmp.eq.s32.totalorder %s19, 1
    %p126 = por %p124, %p125
    %p128 = scmp.ne.s32.totalorder %s113, %s127
    %p129 = scmp.eq.s32.totalorder %s19, 0
    %p130 = por %p128, %p129
    %s132 = sadd.s32 %s131, 1
    %p135 = scmp.eq.s32.totalorder %s13, 1
    %p136 = scmp.ne.s32.totalorder %s131, %s133
    %p137 = scmp.eq.s32.totalorder %s13, 0
    %p138 = por %p136, %p137
    %p139 = scmp.ne.s32.totalorder %s131, %s133
    %p140 = scmp.eq.s32.totalorder %s18, 1
    %p141 = por %p139, %p140
    %p142 = scmp.ne.s32.totalorder %s133, %s134
    %p143 = scmp.eq.s32.totalorder %s18, 0
    %p144 = por %p142, %p143
    %p145 = scmp.ne.s32.totalorder %s133, %s134
    %p146 = scmp.eq.s32.totalorder %s19, 1
    %p147 = por %p145, %p146
    %p149 = scmp.ne.s32.totalorder %s134, %s148
    %p150 = scmp.eq.s32.totalorder %s19, 0
    %p151 = por %p149, %p150
    %s153 = sadd.s32 %s152, 1
    %p156 = scmp.eq.s32.totalorder %s13, 1
    %p157 = scmp.ne.s32.totalorder %s152, %s154
    %p158 = scmp.eq.s32.totalorder %s13, 0
    %p159 = por %p157, %p158
    %p160 = scmp.ne.s32.totalorder %s152, %s154
    %p161 = scmp.eq.s32.totalorder %s18, 1
    %p162 = por %p160, %p161
    %p163 = scmp.ne.s32.totalorder %s154, %s155
    %p164 = scmp.eq.s32.totalorder %s18, 0
    %p165 = por %p163, %p164
    %p166 = scmp.ne.s32.totalorder %s154, %s155
    %p167 = scmp.eq.s32.totalorder %s19, 1
    %p168 = por %p166, %p167
    %p170 = scmp.ne.s32.totalorder %s155, %s169
    %p171 = scmp.eq.s32.totalorder %s19, 0
    %p172 = por %p170, %p171
    %s173 = ssub.s32 %s13, %s20
    %p174 = scmp.eq.s32.totalorder %s173, 0
    %s176 = sadd.s32 %s175, 1
    %s177 = scalar_select %p174, %s175, %s176
    %p180 = pneg %p174
    %p181 = scmp.eq.s32.totalorder %s13, 1
    %p182 = por %p180, %p181
    %p183 = scmp.ne.s32.totalorder %s175, %s178
    %p184 = scmp.eq.s32.totalorder %s13, 0
    %p185 = por %p183, %p184
    %p186 = scmp.ne.s32.totalorder %s175, %s178
    %p187 = scmp.eq.s32.totalorder %s18, 1
    %p188 = por %p186, %p187
    %p189 = scmp.ne.s32.totalorder %s178, %s179
    %p190 = scmp.eq.s32.totalorder %s18, 0
    %p191 = por %p189, %p190
    %p192 = scmp.ne.s32.totalorder %s178, %s179
    %p193 = scmp.eq.s32.totalorder %s19, 1
    %p194 = por %p192, %p193
    %p196 = scmp.ne.s32.totalorder %s179, %s195
    %p197 = scmp.eq.s32.totalorder %s19, 0
    %p198 = por %p196, %p197
    %p199 = scmp.le.s32.totalorder 1, %s13
    %p200 = scmp.lt.s32.totalorder %s13, 3
    %p201 = pnand %p199, %p200
    %p202 = pneg %p201
    // Predicated region
    $region9: #{fc_model_forward.1} parent=5 // pred_check
      _
    $region10: #{fc_model_forward.1} parent=5 // pred_check_branch
      %204 = sbr.rel (%p201) target = $region12
    $region11: #{fc_model_forward.1} parent=5 // pred_region
      %s205 = ssub.s32 %s13, 1
      // Predicated region
      $region13: #{fc_model_forward.1} parent=11 // pred_check
        %p206 = pneg %p60
      $region14: #{fc_model_forward.1} parent=11 // pred_check_branch
        %208 = sbr.rel (%p206) target = $region16
      $region15: #{fc_model_forward.1} parent=11 // pred_region
        _
      $region16: #{fc_model_forward.1} parent=11 // pred_fallthru
        _
      // Predicated region
      $region17: #{fc_model_forward.1} parent=11 // pred_check
        %p209 = pneg %p81
      $region18: #{fc_model_forward.1} parent=11 // pred_check_branch
        %211 = sbr.rel (%p209) target = $region20
      $region19: #{fc_model_forward.1} parent=11 // pred_region
        _
      $region20: #{fc_model_forward.1} parent=11 // pred_fallthru
        _
      // Predicated region
      $region21: #{fc_model_forward.1} parent=11 // pred_check
        %p212 = pneg %p102
      $region22: #{fc_model_forward.1} parent=11 // pred_check_branch
        %214 = sbr.rel (%p212) target = $region24
      $region23: #{fc_model_forward.1} parent=11 // pred_region
        _
      $region24: #{fc_model_forward.1} parent=11 // pred_fallthru
        _
      // Predicated region
      $region25: #{fc_model_forward.1} parent=11 // pred_check
        %p215 = pneg %p123
      $region26: #{fc_model_forward.1} parent=11 // pred_check_branch
        %217 = sbr.rel (%p215) target = $region28
      $region27: #{fc_model_forward.1} parent=11 // pred_region
        _
      $region28: #{fc_model_forward.1} parent=11 // pred_fallthru
        _
      // Predicated region
      $region29: #{fc_model_forward.1} parent=11 // pred_check
        %p218 = pneg %p144
      $region30: #{fc_model_forward.1} parent=11 // pred_check_branch
        %220 = sbr.rel (%p218) target = $region32
      $region31: #{fc_model_forward.1} parent=11 // pred_region
        _
      $region32: #{fc_model_forward.1} parent=11 // pred_fallthru
        _
      // Predicated region
      $region33: #{fc_model_forward.1} parent=11 // pred_check
        %p221 = pneg %p165
      $region34: #{fc_model_forward.1} parent=11 // pred_check_branch
        %223 = sbr.rel (%p221) target = $region36
      $region35: #{fc_model_forward.1} parent=11 // pred_region
        _
      $region36: #{fc_model_forward.1} parent=11 // pred_fallthru
        _
    $region12: #{fc_model_forward.1} parent=5 // pred_fallthru
      _
    %p224 = scmp.lt.s32.totalorder %s13, 2
    // Predicated region
    $region37: #{fc_model_forward.1} parent=5 // pred_check
      %p225 = pneg %p224
    $region38: #{fc_model_forward.1} parent=5 // pred_check_branch
      %227 = sbr.rel (%p225) target = $region40
    $region39: #{fc_model_forward.1} parent=5 // pred_region
      // Predicated region
      $region41: #{fc_model_forward.1} parent=39 // pred_check
        %p228 = pneg %p33
      $region42: #{fc_model_forward.1} parent=39 // pred_check_branch
        %230 = sbr.rel (%p228) target = $region44
      $region43: #{fc_model_forward.1} parent=39 // pred_region
        %s231 = smul.u32 32, %s13
        %p232 = scmp.lt.s32.totalorder %s231, 63
        %s233 = scalar_select %p232, %s231, 63
        %s234 = smul.addr %s233, 8
        %s235 = scalar_lea.vmem %s0, %s234
        %s236 = smul.u32 32, %s13
      $region44: #{fc_model_forward.1} parent=39 // pred_fallthru
        _
    $region40: #{fc_model_forward.1} parent=5 // pred_fallthru
      _
    %p237 = scmp.le.s32.totalorder 1, %s13
    %p238 = scmp.lt.s32.totalorder %s13, 3
    %p239 = pnand %p237, %p238
    %p240 = pneg %p239
    // Predicated region
    $region45: #{fc_model_forward.1} parent=5 // pred_check
      _
    $region46: #{fc_model_forward.1} parent=5 // pred_check_branch
      %242 = sbr.rel (%p239) target = $region48
    $region47: #{fc_model_forward.1} parent=5 // pred_region
      %s243 = ssub.s32 %s13, 1
      %s244 = smul.u32 32, %s18
      %p245 = scmp.lt.s32.totalorder %s244, 63
      %s246 = scalar_select %p245, %s244, 63
      %s247 = smul.addr %s246, 8
      %s248 = scalar_lea.vmem %s0, %s247
      %p249 = pneg %p39
      %p250 = pneg %p36
      %p251 = pneg %p60
      %p252 = pneg %p57
      %p253 = pneg %p81
      %p254 = pneg %p78
      %p255 = pneg %p102
      %p256 = pneg %p99
      %p257 = pneg %p123
      %p258 = pneg %p120
      %p259 = pneg %p144
      %p260 = pneg %p141
      %p261 = pneg %p165
      %p262 = pneg %p162
      %p263 = pneg %p191
      %p264 = pneg %p188
      %s265 = smul.u32 32, %s18
      %p266 = scmp.lt.s32.totalorder %s265, 63
      %s267 = scalar_select %p266, %s265, 63
      %s268 = smul.addr %s267, 8
      %s269 = scalar_lea.vmem %s7, %s268
      %s270 = smul.u32 32, %s18
      %p271 = scmp.lt.s32.totalorder %s270, 63
      %s272 = scalar_select %p271, %s270, 63
      %s273 = smul.addr %s272, 8
      %s274 = scalar_lea.vmem %s0, %s273
      %s275 = smul.u32 32, %s18
      %s276 = smul.u32 32, %s18
      %p277 = scmp.lt.s32.totalorder %s276, 63
      %s278 = scalar_select %p277, %s276, 63
      %s279 = smul.addr %s278, 8
      %s280 = scalar_lea.vmem %s7, %s279
      %s281 = smul.u32 32, %s18
      %v283 = vld [vmem:[%s274] sm:$0xff]
      %v284 = vld [vmem:[%s274 + $0x8] sm:$0xff]
      %v285 = vld [vmem:[%s274 + $0x10] sm:$0xff]
      %v286 = vld [vmem:[%s274 + $0x18] sm:$0xff]
      %v287 = vld [vmem:[%s274 + $0x20] sm:$0xff]
      %v288 = vld [vmem:[%s274 + $0x28] sm:$0xff]
      %v289 = vld [vmem:[%s274 + $0x30] sm:$0xff]
      %v290 = vld [vmem:[%s274 + $0x38] sm:$0xff]
      %v291 = vld [vmem:[%s274 + $0x40] sm:$0xff]
      %v292 = vld [vmem:[%s274 + $0x48] sm:$0xff]
      %v293 = vld [vmem:[%s274 + $0x50] sm:$0xff]
      %v294 = vld [vmem:[%s274 + $0x58] sm:$0xff]
      %v295 = vld [vmem:[%s274 + $0x60] sm:$0xff]
      %v296 = vld [vmem:[%s274 + $0x68] sm:$0xff]
      %v297 = vld [vmem:[%s274 + $0x70] sm:$0xff]
      %v298 = vld [vmem:[%s274 + $0x78] sm:$0xff]
      %v299 = vld [vmem:[%s274 + $0x80] sm:$0xff]
      %v300 = vld [vmem:[%s274 + $0x88] sm:$0xff]
      %v301 = vld [vmem:[%s274 + $0x90] sm:$0xff]
      %v302 = vld [vmem:[%s274 + $0x98] sm:$0xff]
      %v303 = vld [vmem:[%s274 + $0xa0] sm:$0xff]
      %v304 = vld [vmem:[%s274 + $0xa8] sm:$0xff]
      %v305 = vld [vmem:[%s274 + $0xb0] sm:$0xff]
      %v306 = vld [vmem:[%s274 + $0xb8] sm:$0xff]
      %v307 = vld [vmem:[%s274 + $0xc0] sm:$0xff]
      %v308 = vld [vmem:[%s274 + $0xc8] sm:$0xff]
      %v309 = vld [vmem:[%s274 + $0xd0] sm:$0xff]
      %v310 = vld [vmem:[%s274 + $0xd8] sm:$0xff]
      %v311 = vld [vmem:[%s274 + $0xe0] sm:$0xff]
      %v312 = vld [vmem:[%s274 + $0xe8] sm:$0xff]
      %v313 = vld [vmem:[%s274 + $0xf0] sm:$0xff]
      %v314 = vld [vmem:[%s274 + $0xf8] sm:$0xff]
      %v315 = vpack.c.bf16 %v284, %v283
      %v316 = vpack.c.bf16 %v286, %v285
      %v317 = vpack.c.bf16 %v288, %v287
      %v318 = vpack.c.bf16 %v290, %v289
      %v319 = vpack.c.bf16 %v292, %v291
      %v320 = vpack.c.bf16 %v294, %v293
      %v321 = vpack.c.bf16 %v296, %v295
      %v322 = vpack.c.bf16 %v298, %v297
      %v323 = vpack.c.bf16 %v300, %v299
      %v324 = vpack.c.bf16 %v302, %v301
      %v325 = vpack.c.bf16 %v304, %v303
      %v326 = vpack.c.bf16 %v306, %v305
      %v327 = vpack.c.bf16 %v308, %v307
      %v328 = vpack.c.bf16 %v310, %v309
      %v329 = vpack.c.bf16 %v312, %v311
      %v330 = vpack.c.bf16 %v314, %v313
      %v331 = vld [vmem:[%s1] sm:$0xf]
      %v332 = vld [vmem:[%s1 + $0x4] sm:$0xf]
      %v333 = vld [vmem:[%s1 + $0x8] sm:$0xf]
      %v334 = vld [vmem:[%s1 + $0xc] sm:$0xf]
      %v335 = vld [vmem:[%s2] sm:$0x1]
      %v337 = vlaneseq
      %v338 = vshrl.u32 %v337, 7
      %v339 = vsub.s32 0, %v338
      %v340 = vrot.slane %v335, %v339
      %v346 = vunpack.c.l.b16 %v331
      %v347 = vunpack.c.l.b16 %v332
      %v348 = vunpack.c.l.b16 %v333
      %v349 = vunpack.c.l.b16 %v334
      %v350 = vpack.c.b16 %v347, %v346
      %v351 = vpack.c.b16 %v349, %v348
      %vm354 = vcmask 261120
      %v356 = vsel %vm354, %v315, 0
      %v359 = vsel %vm354, %v316, 0
      %v362 = vsel %vm354, %v317, 0
      %v365 = vsel %vm354, %v318, 0
      %v368 = vsel %vm354, %v319, 0
      %v371 = vsel %vm354, %v320, 0
      %v374 = vsel %vm354, %v321, 0
      %v377 = vsel %vm354, %v322, 0
      %v380 = vsel %vm354, %v323, 0
      %v383 = vsel %vm354, %v324, 0
      %v386 = vsel %vm354, %v325, 0
      %v389 = vsel %vm354, %v326, 0
      %v392 = vsel %vm354, %v327, 0
      %v395 = vsel %vm354, %v328, 0
      %v398 = vsel %vm354, %v329, 0
      %v401 = vsel %vm354, %v330, 0
      %403 = vmatprep.subr.bf16.mxu0 0
      %404 = vmatpush1.bf16.msra.mxu0 %v350
      %405 = vmatprep.subr.bf16.mxu0 0
      %406 = vmatpush1.bf16.msra.mxu0 %v351
      %407 = vmatprep.subr.bf16.mxu0 0
      %408 = vmatpush1.bf16.msra.mxu0 0
      %409 = vmatprep.subr.bf16.mxu0 0
      %410 = vmatpush1.bf16.msra.mxu0 0
      %411 = vmatprep.subr.bf16.mxu0 0
      %412 = vmatpush1.bf16.msra.mxu0 0
      %413 = vmatprep.subr.bf16.mxu0 0
      %414 = vmatpush1.bf16.msra.mxu0 0
      %415 = vmatprep.subr.bf16.mxu0 0
      %416 = vmatpush1.bf16.msra.mxu0 0
      %417 = vmatprep.subr.bf16.mxu0 0
      %418 = vmatpush1.bf16.msra.mxu0 0
      %419 = vmatprep.subr.bf16.mxu0 0
      %420 = vmatpush1.bf16.msra.mxu0 0
      %421 = vmatprep.subr.bf16.mxu0 0
      %422 = vmatpush1.bf16.msra.mxu0 0
      %423 = vmatprep.subr.bf16.mxu0 0
      %424 = vmatpush1.bf16.msra.mxu0 0
      %425 = vmatprep.subr.bf16.mxu0 0
      %426 = vmatpush1.bf16.msra.mxu0 0
      %427 = vmatprep.subr.bf16.mxu0 0
      %428 = vmatpush1.bf16.msra.mxu0 0
      %429 = vmatprep.subr.bf16.mxu0 0
      %430 = vmatpush1.bf16.msra.mxu0 0
      %431 = vmatprep.subr.bf16.mxu0 0
      %432 = vmatpush1.bf16.msra.mxu0 0
      %433 = vmatprep.subr.bf16.mxu0 0
      %434 = vmatpush1.bf16.msra.mxu0 0
      %435 = vmatprep.mubr.bf16.mxu0 0
      %436 = vmatmul.mubr.bf16.gmra.mrb[0].mxu0 %v356
      %v437 = vpop.f32.mrb[0].mxu0
      %v438 = vadd.f32 %v340, %v437
      %v439 = vpop.f32.mrb[0].mxu0
      %v440 = vpop.f32.mrb[0].mxu0
      %v441 = vadd.f32 %v340, %v440
      %v442 = vpop.f32.mrb[0].mxu0
      %443 = vmatprep.mubr.bf16.mxu0 0
      %444 = vmatmul.mubr.bf16.gmra.mrb[0].mxu0 %v359
      %v445 = vpop.f32.mrb[0].mxu0
      %v446 = vadd.f32 %v340, %v445
      %v447 = vpop.f32.mrb[0].mxu0
      %v448 = vpop.f32.mrb[0].mxu0
      %v449 = vadd.f32 %v340, %v448
      %v450 = vpop.f32.mrb[0].mxu0
      %451 = vmatprep.mubr.bf16.mxu0 0
      %452 = vmatmul.mubr.bf16.gmra.mrb[0].mxu0 %v362
      %v453 = vpop.f32.mrb[0].mxu0
      %v454 = vadd.f32 %v340, %v453
      %v455 = vpop.f32.mrb[0].mxu0
      %v456 = vpop.f32.mrb[0].mxu0
      %v457 = vadd.f32 %v340, %v456
      %v458 = vpop.f32.mrb[0].mxu0
      %459 = vmatprep.mubr.bf16.mxu0 0
      %460 = vmatmul.mubr.bf16.gmra.mrb[0].mxu0 %v365
      %v461 = vpop.f32.mrb[0].mxu0
      %v462 = vadd.f32 %v340, %v461
      %v463 = vpop.f32.mrb[0].mxu0
      %v464 = vpop.f32.mrb[0].mxu0
      %v465 = vadd.f32 %v340, %v464
      %v466 = vpop.f32.mrb[0].mxu0
      %467 = vmatprep.mubr.bf16.mxu0 0
      %468 = vmatmul.mubr.bf16.gmra.mrb[0].mxu0 %v368
      %v469 = vpop.f32.mrb[0].mxu0
      %v470 = vadd.f32 %v340, %v469
      %v471 = vpop.f32.mrb[0].mxu0
      %v472 = vpop.f32.mrb[0].mxu0
      %v473 = vadd.f32 %v340, %v472
      %v474 = vpop.f32.mrb[0].mxu0
      %475 = vmatprep.mubr.bf16.mxu0 0
      %476 = vmatmul.mubr.bf16.gmra.mrb[0].mxu0 %v371
      %v477 = vpop.f32.mrb[0].mxu0
      %v478 = vadd.f32 %v340, %v477
      %v479 = vpop.f32.mrb[0].mxu0
      %v480 = vpop.f32.mrb[0].mxu0
      %v481 = vadd.f32 %v340, %v480
      %v482 = vpop.f32.mrb[0].mxu0
      %483 = vmatprep.mubr.bf16.mxu0 0
      %484 = vmatmul.mubr.bf16.gmra.mrb[0].mxu0 %v374
      %v485 = vpop.f32.mrb[0].mxu0
      %v486 = vadd.f32 %v340, %v485
      %v487 = vpop.f32.mrb[0].mxu0
      %v488 = vpop.f32.mrb[0].mxu0
      %v489 = vadd.f32 %v340, %v488
      %v490 = vpop.f32.mrb[0].mxu0
      %491 = vmatprep.mubr.bf16.mxu0 0
      %492 = vmatmul.mubr.bf16.gmra.mrb[0].mxu0 %v377
      %v493 = vpop.f32.mrb[0].mxu0
      %v494 = vadd.f32 %v340, %v493
      %v495 = vpop.f32.mrb[0].mxu0
      %v496 = vpop.f32.mrb[0].mxu0
      %v497 = vadd.f32 %v340, %v496
      %v498 = vpop.f32.mrb[0].mxu0
      %499 = vmatprep.mubr.bf16.mxu0 0
      %500 = vmatmul.mubr.bf16.gmra.mrb[0].mxu0 %v380
      %v501 = vpop.f32.mrb[0].mxu0
      %v502 = vadd.f32 %v340, %v501
      %v503 = vpop.f32.mrb[0].mxu0
      %v504 = vpop.f32.mrb[0].mxu0
      %v505 = vadd.f32 %v340, %v504
      %v506 = vpop.f32.mrb[0].mxu0
      %507 = vmatprep.mubr.bf16.mxu0 0
      %508 = vmatmul.mubr.bf16.gmra.mrb[0].mxu0 %v383
      %v509 = vpop.f32.mrb[0].mxu0
      %v510 = vadd.f32 %v340, %v509
      %v511 = vpop.f32.mrb[0].mxu0
      %v512 = vpop.f32.mrb[0].mxu0
      %v513 = vadd.f32 %v340, %v512
      %v514 = vpop.f32.mrb[0].mxu0
      %515 = vmatprep.mubr.bf16.mxu0 0
      %516 = vmatmul.mubr.bf16.gmra.mrb[0].mxu0 %v386
      %v517 = vpop.f32.mrb[0].mxu0
      %v518 = vadd.f32 %v340, %v517
      %v519 = vpop.f32.mrb[0].mxu0
      %v520 = vpop.f32.mrb[0].mxu0
      %v521 = vadd.f32 %v340, %v520
      %v522 = vpop.f32.mrb[0].mxu0
      %523 = vmatprep.mubr.bf16.mxu0 0
      %524 = vmatmul.mubr.bf16.gmra.mrb[0].mxu0 %v389
      %v525 = vpop.f32.mrb[0].mxu0
      %v526 = vadd.f32 %v340, %v525
      %v527 = vpop.f32.mrb[0].mxu0
      %v528 = vpop.f32.mrb[0].mxu0
      %v529 = vadd.f32 %v340, %v528
      %v530 = vpop.f32.mrb[0].mxu0
      %531 = vmatprep.mubr.bf16.mxu0 0
      %532 = vmatmul.mubr.bf16.gmra.mrb[0].mxu0 %v392
      %v533 = vpop.f32.mrb[0].mxu0
      %v534 = vadd.f32 %v340, %v533
      %v535 = vpop.f32.mrb[0].mxu0
      %v536 = vpop.f32.mrb[0].mxu0
      %v537 = vadd.f32 %v340, %v536
      %v538 = vpop.f32.mrb[0].mxu0
      %539 = vmatprep.mubr.bf16.mxu0 0
      %540 = vmatmul.mubr.bf16.gmra.mrb[0].mxu0 %v395
      %v541 = vpop.f32.mrb[0].mxu0
      %v542 = vadd.f32 %v340, %v541
      %v543 = vpop.f32.mrb[0].mxu0
      %v544 = vpop.f32.mrb[0].mxu0
      %v545 = vadd.f32 %v340, %v544
      %v546 = vpop.f32.mrb[0].mxu0
      %547 = vmatprep.mubr.bf16.mxu0 0
      %548 = vmatmul.mubr.bf16.gmra.mrb[0].mxu0 %v398
      %v549 = vpop.f32.mrb[0].mxu0
      %v550 = vadd.f32 %v340, %v549
      %v551 = vpop.f32.mrb[0].mxu0
      %v552 = vpop.f32.mrb[0].mxu0
      %v553 = vadd.f32 %v340, %v552
      %v554 = vpop.f32.mrb[0].mxu0
      %555 = vmatprep.mubr.bf16.mxu0 0
      %556 = vmatmul.mubr.bf16.gmra.mrb[0].mxu0 %v401
      %v557 = vpop.f32.mrb[0].mxu0
      %v558 = vadd.f32 %v340, %v557
      %v559 = vpop.f32.mrb[0].mxu0
      %v560 = vpop.f32.mrb[0].mxu0
      %v561 = vadd.f32 %v340, %v560
      %v562 = vpop.f32.mrb[0].mxu0
      %563 = vdwg.mxu0
      %v564 = vmax.f32 %v438, 0.0
      %v565 = vmax.f32 %v441, 0.0
      %v566 = vmax.f32 %v446, 0.0
      %v567 = vmax.f32 %v449, 0.0
      %v568 = vmax.f32 %v454, 0.0
      %v569 = vmax.f32 %v457, 0.0
      %v570 = vmax.f32 %v462, 0.0
      %v571 = vmax.f32 %v465, 0.0
      %v572 = vmax.f32 %v470, 0.0
      %v573 = vmax.f32 %v473, 0.0
      %v574 = vmax.f32 %v478, 0.0
      %v575 = vmax.f32 %v481, 0.0
      %v576 = vmax.f32 %v486, 0.0
      %v577 = vmax.f32 %v489, 0.0
      %v578 = vmax.f32 %v494, 0.0
      %v579 = vmax.f32 %v497, 0.0
      %v580 = vmax.f32 %v502, 0.0
      %v581 = vmax.f32 %v505, 0.0
      %v582 = vmax.f32 %v510, 0.0
      %v583 = vmax.f32 %v513, 0.0
      %v584 = vmax.f32 %v518, 0.0
      %v585 = vmax.f32 %v521, 0.0
      %v586 = vmax.f32 %v526, 0.0
      %v587 = vmax.f32 %v529, 0.0
      %v588 = vmax.f32 %v534, 0.0
      %v589 = vmax.f32 %v537, 0.0
      %v590 = vmax.f32 %v542, 0.0
      %v591 = vmax.f32 %v545, 0.0
      %v592 = vmax.f32 %v550, 0.0
      %v593 = vmax.f32 %v553, 0.0
      %v594 = vmax.f32 %v558, 0.0
      %v595 = vmax.f32 %v561, 0.0
      %v596 = vpack.c.bf16 %v565, %v564
      %v597 = vpack.c.bf16 %v567, %v566
      %v598 = vpack.c.bf16 %v569, %v568
      %v599 = vpack.c.bf16 %v571, %v570
      %v600 = vpack.c.bf16 %v573, %v572
      %v601 = vpack.c.bf16 %v575, %v574
      %v602 = vpack.c.bf16 %v577, %v576
      %v603 = vpack.c.bf16 %v579, %v578
      %v604 = vpack.c.bf16 %v581, %v580
      %v605 = vpack.c.bf16 %v583, %v582
      %v606 = vpack.c.bf16 %v585, %v584
      %v607 = vpack.c.bf16 %v587, %v586
      %v608 = vpack.c.bf16 %v589, %v588
      %v609 = vpack.c.bf16 %v591, %v590
      %v610 = vpack.c.bf16 %v593, %v592
      %v611 = vpack.c.bf16 %v595, %v594
      %v612 = vld [vmem:[%s3] sm:$0xf]
      %v613 = vld [vmem:[%s3 + $0x4] sm:$0xf]
      %v614 = vld [vmem:[%s3 + $0x8] sm:$0xf]
      %v615 = vld [vmem:[%s3 + $0xc] sm:$0xf]
      %v616 = vld [vmem:[%s3 + $0x10] sm:$0xf]
      %v617 = vld [vmem:[%s3 + $0x14] sm:$0xf]
      %v618 = vld [vmem:[%s3 + $0x18] sm:$0xf]
      %v619 = vld [vmem:[%s3 + $0x1c] sm:$0xf]
      %v620 = vld [vmem:[%s3 + $0x20] sm:$0xf]
      %v621 = vld [vmem:[%s3 + $0x24] sm:$0xf]
      %v622 = vld [vmem:[%s3 + $0x28] sm:$0xf]
      %v623 = vld [vmem:[%s3 + $0x2c] sm:$0xf]
      %v624 = vld [vmem:[%s3 + $0x30] sm:$0xf]
      %v625 = vld [vmem:[%s3 + $0x34] sm:$0xf]
      %v626 = vld [vmem:[%s3 + $0x38] sm:$0xf]
      %v627 = vld [vmem:[%s3 + $0x3c] sm:$0xf]
      %v628 = vld [vmem:[%s4] sm:$0x1]
      %v630 = vlaneseq
      %v631 = vshrl.u32 %v630, 7
      %v632 = vsub.s32 0, %v631
      %v633 = vrot.slane %v628, %v632
      %v651 = vunpack.c.l.b16 %v612
      %v652 = vunpack.c.l.b16 %v613
      %v653 = vunpack.c.l.b16 %v614
      %v654 = vunpack.c.l.b16 %v615
      %v655 = vunpack.c.l.b16 %v616
      %v656 = vunpack.c.l.b16 %v617
      %v657 = vunpack.c.l.b16 %v618
      %v658 = vunpack.c.l.b16 %v619
      %v659 = vunpack.c.l.b16 %v620
      %v660 = vunpack.c.l.b16 %v621
      %v661 = vunpack.c.l.b16 %v622
      %v662 = vunpack.c.l.b16 %v623
      %v663 = vunpack.c.l.b16 %v624
      %v664 = vunpack.c.l.b16 %v625
      %v665 = vunpack.c.l.b16 %v626
      %v666 = vunpack.c.l.b16 %v627
      %v667 = vpack.c.b16 %v652, %v651
      %v668 = vpack.c.b16 %v654, %v653
      %v669 = vpack.c.b16 %v656, %v655
      %v670 = vpack.c.b16 %v658, %v657
      %v671 = vpack.c.b16 %v660, %v659
      %v672 = vpack.c.b16 %v662, %v661
      %v673 = vpack.c.b16 %v664, %v663
      %v674 = vpack.c.b16 %v666, %v665
      %683 = vmatprep.subr.bf16.mxu0 0
      %684 = vmatpush1.bf16.msra.mxu0 %v667
      %685 = vmatprep.subr.bf16.mxu0 0
      %686 = vmatpush1.bf16.msra.mxu0 %v668
      %687 = vmatprep.subr.bf16.mxu0 0
      %688 = vmatpush1.bf16.msra.mxu0 %v669
      %689 = vmatprep.subr.bf16.mxu0 0
      %690 = vmatpush1.bf16.msra.mxu0 %v670
      %691 = vmatprep.subr.bf16.mxu0 0
      %692 = vmatpush1.bf16.msra.mxu0 %v671
      %693 = vmatprep.subr.bf16.mxu0 0
      %694 = vmatpush1.bf16.msra.mxu0 %v672
      %695 = vmatprep.subr.bf16.mxu0 0
      %696 = vmatpush1.bf16.msra.mxu0 %v673
      %697 = vmatprep.subr.bf16.mxu0 0
      %698 = vmatpush1.bf16.msra.mxu0 %v674
      %699 = vmatprep.subr.bf16.mxu0 0
      %700 = vmatpush1.bf16.msra.mxu0 0
      %701 = vmatprep.subr.bf16.mxu0 0
      %702 = vmatpush1.bf16.msra.mxu0 0
      %703 = vmatprep.subr.bf16.mxu0 0
      %704 = vmatpush1.bf16.msra.mxu0 0
      %705 = vmatprep.subr.bf16.mxu0 0
      %706 = vmatpush1.bf16.msra.mxu0 0
      %707 = vmatprep.subr.bf16.mxu0 0
      %708 = vmatpush1.bf16.msra.mxu0 0
      %709 = vmatprep.subr.bf16.mxu0 0
      %710 = vmatpush1.bf16.msra.mxu0 0
      %711 = vmatprep.subr.bf16.mxu0 0
      %712 = vmatpush1.bf16.msra.mxu0 0
      %713 = vmatprep.subr.bf16.mxu0 0
      %714 = vmatpush1.bf16.msra.mxu0 0
      %715 = vmatprep.mubr.bf16.mxu0 0
      %716 = vmatmul.mubr.bf16.gmra.mrb[0].mxu0 %v596
      %v717 = vpop.f32.mrb[0].mxu0
      %v718 = vadd.f32 %v633, %v717
      %v719 = vpop.f32.mrb[0].mxu0
      %v720 = vpop.f32.mrb[0].mxu0
      %v721 = vadd.f32 %v633, %v720
      %v722 = vpop.f32.mrb[0].mxu0
      %723 = vmatprep.mubr.bf16.mxu0 0
      %724 = vmatmul.mubr.bf16.gmra.mrb[0].mxu0 %v597
      %v725 = vpop.f32.mrb[0].mxu0
      %v726 = vadd.f32 %v633, %v725
      %v727 = vpop.f32.mrb[0].mxu0
      %v728 = vpop.f32.mrb[0].mxu0
      %v729 = vadd.f32 %v633, %v728
      %v730 = vpop.f32.mrb[0].mxu0
      %731 = vmatprep.mubr.bf16.mxu0 0
      %732 = vmatmul.mubr.bf16.gmra.mrb[0].mxu0 %v598
      %v733 = vpop.f32.mrb[0].mxu0
      %v734 = vadd.f32 %v633, %v733
      %v735 = vpop.f32.mrb[0].mxu0
      %v736 = vpop.f32.mrb[0].mxu0
      %v737 = vadd.f32 %v633, %v736
      %v738 = vpop.f32.mrb[0].mxu0
      %739 = vmatprep.mubr.bf16.mxu0 0
      %740 = vmatmul.mubr.bf16.gmra.mrb[0].mxu0 %v599
      %v741 = vpop.f32.mrb[0].mxu0
      %v742 = vadd.f32 %v633, %v741
      %v743 = vpop.f32.mrb[0].mxu0
      %v744 = vpop.f32.mrb[0].mxu0
      %v745 = vadd.f32 %v633, %v744
      %v746 = vpop.f32.mrb[0].mxu0
      %747 = vmatprep.mubr.bf16.mxu0 0
      %748 = vmatmul.mubr.bf16.gmra.mrb[0].mxu0 %v600
      %v749 = vpop.f32.mrb[0].mxu0
      %v750 = vadd.f32 %v633, %v749
      %v751 = vpop.f32.mrb[0].mxu0
      %v752 = vpop.f32.mrb[0].mxu0
      %v753 = vadd.f32 %v633, %v752
      %v754 = vpop.f32.mrb[0].mxu0
      %755 = vmatprep.mubr.bf16.mxu0 0
      %756 = vmatmul.mubr.bf16.gmra.mrb[0].mxu0 %v601
      %v757 = vpop.f32.mrb[0].mxu0
      %v758 = vadd.f32 %v633, %v757
      %v759 = vpop.f32.mrb[0].mxu0
      %v760 = vpop.f32.mrb[0].mxu0
      %v761 = vadd.f32 %v633, %v760
      %v762 = vpop.f32.mrb[0].mxu0
      %763 = vmatprep.mubr.bf16.mxu0 0
      %764 = vmatmul.mubr.bf16.gmra.mrb[0].mxu0 %v602
      %v765 = vpop.f32.mrb[0].mxu0
      %v766 = vadd.f32 %v633, %v765
      %v767 = vpop.f32.mrb[0].mxu0
      %v768 = vpop.f32.mrb[0].mxu0
      %v769 = vadd.f32 %v633, %v768
      %v770 = vpop.f32.mrb[0].mxu0
      %771 = vmatprep.mubr.bf16.mxu0 0
      %772 = vmatmul.mubr.bf16.gmra.mrb[0].mxu0 %v603
      %v773 = vpop.f32.mrb[0].mxu0
      %v774 = vadd.f32 %v633, %v773
      %v775 = vpop.f32.mrb[0].mxu0
      %v776 = vpop.f32.mrb[0].mxu0
      %v777 = vadd.f32 %v633, %v776
      %v778 = vpop.f32.mrb[0].mxu0
      %779 = vmatprep.mubr.bf16.mxu0 0
      %780 = vmatmul.mubr.bf16.gmra.mrb[0].mxu0 %v604
      %v781 = vpop.f32.mrb[0].mxu0
      %v782 = vadd.f32 %v633, %v781
      %v783 = vpop.f32.mrb[0].mxu0
      %v784 = vpop.f32.mrb[0].mxu0
      %v785 = vadd.f32 %v633, %v784
      %v786 = vpop.f32.mrb[0].mxu0
      %787 = vmatprep.mubr.bf16.mxu0 0
      %788 = vmatmul.mubr.bf16.gmra.mrb[0].mxu0 %v605
      %v789 = vpop.f32.mrb[0].mxu0
      %v790 = vadd.f32 %v633, %v789
      %v791 = vpop.f32.mrb[0].mxu0
      %v792 = vpop.f32.mrb[0].mxu0
      %v793 = vadd.f32 %v633, %v792
      %v794 = vpop.f32.mrb[0].mxu0
      %795 = vmatprep.mubr.bf16.mxu0 0
      %796 = vmatmul.mubr.bf16.gmra.mrb[0].mxu0 %v606
      %v797 = vpop.f32.mrb[0].mxu0
      %v798 = vadd.f32 %v633, %v797
      %v799 = vpop.f32.mrb[0].mxu0
      %v800 = vpop.f32.mrb[0].mxu0
      %v801 = vadd.f32 %v633, %v800
      %v802 = vpop.f32.mrb[0].mxu0
      %803 = vmatprep.mubr.bf16.mxu0 0
      %804 = vmatmul.mubr.bf16.gmra.mrb[0].mxu0 %v607
      %v805 = vpop.f32.mrb[0].mxu0
      %v806 = vadd.f32 %v633, %v805
      %v807 = vpop.f32.mrb[0].mxu0
      %v808 = vpop.f32.mrb[0].mxu0
      %v809 = vadd.f32 %v633, %v808
      %v810 = vpop.f32.mrb[0].mxu0
      %811 = vmatprep.mubr.bf16.mxu0 0
      %812 = vmatmul.mubr.bf16.gmra.mrb[0].mxu0 %v608
      %v813 = vpop.f32.mrb[0].mxu0
      %v814 = vadd.f32 %v633, %v813
      %v815 = vpop.f32.mrb[0].mxu0
      %v816 = vpop.f32.mrb[0].mxu0
      %v817 = vadd.f32 %v633, %v816
      %v818 = vpop.f32.mrb[0].mxu0
      %819 = vmatprep.mubr.bf16.mxu0 0
      %820 = vmatmul.mubr.bf16.gmra.mrb[0].mxu0 %v609
      %v821 = vpop.f32.mrb[0].mxu0
      %v822 = vadd.f32 %v633, %v821
      %v823 = vpop.f32.mrb[0].mxu0
      %v824 = vpop.f32.mrb[0].mxu0
      %v825 = vadd.f32 %v633, %v824
      %v826 = vpop.f32.mrb[0].mxu0
      %827 = vmatprep.mubr.bf16.mxu0 0
      %828 = vmatmul.mubr.bf16.gmra.mrb[0].mxu0 %v610
      %v829 = vpop.f32.mrb[0].mxu0
      %v830 = vadd.f32 %v633, %v829
      %v831 = vpop.f32.mrb[0].mxu0
      %v832 = vpop.f32.mrb[0].mxu0
      %v833 = vadd.f32 %v633, %v832
      %v834 = vpop.f32.mrb[0].mxu0
      %835 = vmatprep.mubr.bf16.mxu0 0
      %836 = vmatmul.mubr.bf16.gmra.mrb[0].mxu0 %v611
      %v837 = vpop.f32.mrb[0].mxu0
      %v838 = vadd.f32 %v633, %v837
      %v839 = vpop.f32.mrb[0].mxu0
      %v840 = vpop.f32.mrb[0].mxu0
      %v841 = vadd.f32 %v633, %v840
      %v842 = vpop.f32.mrb[0].mxu0
      %843 = vdwg.mxu0
      %v844 = vmax.f32 %v718, 0.0
      %v845 = vmax.f32 %v721, 0.0
      %v846 = vmax.f32 %v726, 0.0
      %v847 = vmax.f32 %v729, 0.0
      %v848 = vmax.f32 %v734, 0.0
      %v849 = vmax.f32 %v737, 0.0
      %v850 = vmax.f32 %v742, 0.0
      %v851 = vmax.f32 %v745, 0.0
      %v852 = vmax.f32 %v750, 0.0
      %v853 = vmax.f32 %v753, 0.0
      %v854 = vmax.f32 %v758, 0.0
      %v855 = vmax.f32 %v761, 0.0
      %v856 = vmax.f32 %v766, 0.0
      %v857 = vmax.f32 %v769, 0.0
      %v858 = vmax.f32 %v774, 0.0
      %v859 = vmax.f32 %v777, 0.0
      %v860 = vmax.f32 %v782, 0.0
      %v861 = vmax.f32 %v785, 0.0
      %v862 = vmax.f32 %v790, 0.0
      %v863 = vmax.f32 %v793, 0.0
      %v864 = vmax.f32 %v798, 0.0
      %v865 = vmax.f32 %v801, 0.0
      %v866 = vmax.f32 %v806, 0.0
      %v867 = vmax.f32 %v809, 0.0
      %v868 = vmax.f32 %v814, 0.0
      %v869 = vmax.f32 %v817, 0.0
      %v870 = vmax.f32 %v822, 0.0
      %v871 = vmax.f32 %v825, 0.0
      %v872 = vmax.f32 %v830, 0.0
      %v873 = vmax.f32 %v833, 0.0
      %v874 = vmax.f32 %v838, 0.0
      %v875 = vmax.f32 %v841, 0.0
      %v876 = vpack.c.bf16 %v845, %v844
      %v877 = vpack.c.bf16 %v847, %v846
      %v878 = vpack.c.bf16 %v849, %v848
      %v879 = vpack.c.bf16 %v851, %v850
      %v880 = vpack.c.bf16 %v853, %v852
      %v881 = vpack.c.bf16 %v855, %v854
      %v882 = vpack.c.bf16 %v857, %v856
      %v883 = vpack.c.bf16 %v859, %v858
      %v884 = vpack.c.bf16 %v861, %v860
      %v885 = vpack.c.bf16 %v863, %v862
      %v886 = vpack.c.bf16 %v865, %v864
      %v887 = vpack.c.bf16 %v867, %v866
      %v888 = vpack.c.bf16 %v869, %v868
      %v889 = vpack.c.bf16 %v871, %v870
      %v890 = vpack.c.bf16 %v873, %v872
      %v891 = vpack.c.bf16 %v875, %v874
      %v892 = vld [vmem:[%s5] sm:$0xf]
      %v893 = vld [vmem:[%s5 + $0x4] sm:$0xf]
      %v894 = vld [vmem:[%s5 + $0x8] sm:$0xf]
      %v895 = vld [vmem:[%s5 + $0xc] sm:$0xf]
      %v896 = vld [vmem:[%s5 + $0x10] sm:$0xf]
      %v897 = vld [vmem:[%s5 + $0x14] sm:$0xf]
      %v898 = vld [vmem:[%s5 + $0x18] sm:$0xf]
      %v899 = vld [vmem:[%s5 + $0x1c] sm:$0xf]
      %v900 = vld [vmem:[%s5 + $0x20] sm:$0xf]
      %v901 = vld [vmem:[%s5 + $0x24] sm:$0xf]
      %v902 = vld [vmem:[%s5 + $0x28] sm:$0xf]
      %v903 = vld [vmem:[%s5 + $0x2c] sm:$0xf]
      %v904 = vld [vmem:[%s5 + $0x30] sm:$0xf]
      %v905 = vld [vmem:[%s5 + $0x34] sm:$0xf]
      %v906 = vld [vmem:[%s5 + $0x38] sm:$0xf]
      %v907 = vld [vmem:[%s5 + $0x3c] sm:$0xf]
      %v908 = vld [vmem:[%s6] sm:$0x1]
      %v910 = vlaneseq
      %v911 = vshrl.u32 %v910, 7
      %v912 = vsub.s32 0, %v911
      %v913 = vrot.slane %v908, %v912
      %v931 = vunpack.c.l.b16 %v892
      %v932 = vunpack.c.l.b16 %v893
      %v933 = vunpack.c.l.b16 %v894
      %v934 = vunpack.c.l.b16 %v895
      %v935 = vunpack.c.l.b16 %v896
      %v936 = vunpack.c.l.b16 %v897
      %v937 = vunpack.c.l.b16 %v898
      %v938 = vunpack.c.l.b16 %v899
      %v939 = vunpack.c.l.b16 %v900
      %v940 = vunpack.c.l.b16 %v901
      %v941 = vunpack.c.l.b16 %v902
      %v942 = vunpack.c.l.b16 %v903
      %v943 = vunpack.c.l.b16 %v904
      %v944 = vunpack.c.l.b16 %v905
      %v945 = vunpack.c.l.b16 %v906
      %v946 = vunpack.c.l.b16 %v907
      %v947 = vpack.c.b16 %v932, %v931
      %v948 = vpack.c.b16 %v934, %v933
      %v949 = vpack.c.b16 %v936, %v935
      %v950 = vpack.c.b16 %v938, %v937
      %v951 = vpack.c.b16 %v940, %v939
      %v952 = vpack.c.b16 %v942, %v941
      %v953 = vpack.c.b16 %v944, %v943
      %v954 = vpack.c.b16 %v946, %v945
      %963 = vmatprep.subr.bf16.mxu0 0
      %964 = vmatpush1.bf16.msra.mxu0 %v947
      %965 = vmatprep.subr.bf16.mxu0 0
      %966 = vmatpush1.bf16.msra.mxu0 %v948
      %967 = vmatprep.subr.bf16.mxu0 0
      %968 = vmatpush1.bf16.msra.mxu0 %v949
      %969 = vmatprep.subr.bf16.mxu0 0
      %970 = vmatpush1.bf16.msra.mxu0 %v950
      %971 = vmatprep.subr.bf16.mxu0 0
      %972 = vmatpush1.bf16.msra.mxu0 %v951
      %973 = vmatprep.subr.bf16.mxu0 0
      %974 = vmatpush1.bf16.msra.mxu0 %v952
      %975 = vmatprep.subr.bf16.mxu0 0
      %976 = vmatpush1.bf16.msra.mxu0 %v953
      %977 = vmatprep.subr.bf16.mxu0 0
      %978 = vmatpush1.bf16.msra.mxu0 %v954
      %979 = vmatprep.subr.bf16.mxu0 0
      %980 = vmatpush1.bf16.msra.mxu0 0
      %981 = vmatprep.subr.bf16.mxu0 0
      %982 = vmatpush1.bf16.msra.mxu0 0
      %983 = vmatprep.subr.bf16.mxu0 0
      %984 = vmatpush1.bf16.msra.mxu0 0
      %985 = vmatprep.subr.bf16.mxu0 0
      %986 = vmatpush1.bf16.msra.mxu0 0
      %987 = vmatprep.subr.bf16.mxu0 0
      %988 = vmatpush1.bf16.msra.mxu0 0
      %989 = vmatprep.subr.bf16.mxu0 0
      %990 = vmatpush1.bf16.msra.mxu0 0
      %991 = vmatprep.subr.bf16.mxu0 0
      %992 = vmatpush1.bf16.msra.mxu0 0
      %993 = vmatprep.subr.bf16.mxu0 0
      %994 = vmatpush1.bf16.msra.mxu0 0
      %995 = vmatprep.mubr.bf16.mxu0 0
      %996 = vmatmul.mubr.bf16.gmra.mrb[0].mxu0 %v876
      %v997 = vpop.f32.mrb[0].mxu0
      %v998 = vadd.f32 %v913, %v997
      %v999 = vpop.f32.mrb[0].mxu0
      %v1000 = vpop.f32.mrb[0].mxu0
      %v1001 = vadd.f32 %v913, %v1000
      %v1002 = vpop.f32.mrb[0].mxu0
      %1003 = vmatprep.mubr.bf16.mxu0 0
      %1004 = vmatmul.mubr.bf16.gmra.mrb[0].mxu0 %v877
      %v1005 = vpop.f32.mrb[0].mxu0
      %v1006 = vadd.f32 %v913, %v1005
      %v1007 = vpop.f32.mrb[0].mxu0
      %v1008 = vpop.f32.mrb[0].mxu0
      %v1009 = vadd.f32 %v913, %v1008
      %v1010 = vpop.f32.mrb[0].mxu0
      %1011 = vmatprep.mubr.bf16.mxu0 0
      %1012 = vmatmul.mubr.bf16.gmra.mrb[0].mxu0 %v878
      %v1013 = vpop.f32.mrb[0].mxu0
      %v1014 = vadd.f32 %v913, %v1013
      %v1015 = vpop.f32.mrb[0].mxu0
      %v1016 = vpop.f32.mrb[0].mxu0
      %v1017 = vadd.f32 %v913, %v1016
      %v1018 = vpop.f32.mrb[0].mxu0
      %1019 = vmatprep.mubr.bf16.mxu0 0
      %1020 = vmatmul.mubr.bf16.gmra.mrb[0].mxu0 %v879
      %v1021 = vpop.f32.mrb[0].mxu0
      %v1022 = vadd.f32 %v913, %v1021
      %v1023 = vpop.f32.mrb[0].mxu0
      %v1024 = vpop.f32.mrb[0].mxu0
      %v1025 = vadd.f32 %v913, %v1024
      %v1026 = vpop.f32.mrb[0].mxu0
      %1027 = vmatprep.mubr.bf16.mxu0 0
      %1028 = vmatmul.mubr.bf16.gmra.mrb[0].mxu0 %v880
      %v1029 = vpop.f32.mrb[0].mxu0
      %v1030 = vadd.f32 %v913, %v1029
      %v1031 = vpop.f32.mrb[0].mxu0
      %v1032 = vpop.f32.mrb[0].mxu0
      %v1033 = vadd.f32 %v913, %v1032
      %v1034 = vpop.f32.mrb[0].mxu0
      %1035 = vmatprep.mubr.bf16.mxu0 0
      %1036 = vmatmul.mubr.bf16.gmra.mrb[0].mxu0 %v881
      %v1037 = vpop.f32.mrb[0].mxu0
      %v1038 = vadd.f32 %v913, %v1037
      %v1039 = vpop.f32.mrb[0].mxu0
      %v1040 = vpop.f32.mrb[0].mxu0
      %v1041 = vadd.f32 %v913, %v1040
      %v1042 = vpop.f32.mrb[0].mxu0
      %1043 = vmatprep.mubr.bf16.mxu0 0
      %1044 = vmatmul.mubr.bf16.gmra.mrb[0].mxu0 %v882
      %v1045 = vpop.f32.mrb[0].mxu0
      %v1046 = vadd.f32 %v913, %v1045
      %v1047 = vpop.f32.mrb[0].mxu0
      %v1048 = vpop.f32.mrb[0].mxu0
      %v1049 = vadd.f32 %v913, %v1048
      %v1050 = vpop.f32.mrb[0].mxu0
      %1051 = vmatprep.mubr.bf16.mxu0 0
      %1052 = vmatmul.mubr.bf16.gmra.mrb[0].mxu0 %v883
      %v1053 = vpop.f32.mrb[0].mxu0
      %v1054 = vadd.f32 %v913, %v1053
      %v1055 = vpop.f32.mrb[0].mxu0
      %v1056 = vpop.f32.mrb[0].mxu0
      %v1057 = vadd.f32 %v913, %v1056
      %v1058 = vpop.f32.mrb[0].mxu0
      %1059 = vmatprep.mubr.bf16.mxu0 0
      %1060 = vmatmul.mubr.bf16.gmra.mrb[0].mxu0 %v884
      %v1061 = vpop.f32.mrb[0].mxu0
      %v1062 = vadd.f32 %v913, %v1061
      %v1063 = vpop.f32.mrb[0].mxu0
      %v1064 = vpop.f32.mrb[0].mxu0
      %v1065 = vadd.f32 %v913, %v1064
      %v1066 = vpop.f32.mrb[0].mxu0
      %1067 = vmatprep.mubr.bf16.mxu0 0
      %1068 = vmatmul.mubr.bf16.gmra.mrb[0].mxu0 %v885
      %v1069 = vpop.f32.mrb[0].mxu0
      %v1070 = vadd.f32 %v913, %v1069
      %v1071 = vpop.f32.mrb[0].mxu0
      %v1072 = vpop.f32.mrb[0].mxu0
      %v1073 = vadd.f32 %v913, %v1072
      %v1074 = vpop.f32.mrb[0].mxu0
      %1075 = vmatprep.mubr.bf16.mxu0 0
      %1076 = vmatmul.mubr.bf16.gmra.mrb[0].mxu0 %v886
      %v1077 = vpop.f32.mrb[0].mxu0
      %v1078 = vadd.f32 %v913, %v1077
      %v1079 = vpop.f32.mrb[0].mxu0
      %v1080 = vpop.f32.mrb[0].mxu0
      %v1081 = vadd.f32 %v913, %v1080
      %v1082 = vpop.f32.mrb[0].mxu0
      %1083 = vmatprep.mubr.bf16.mxu0 0
      %1084 = vmatmul.mubr.bf16.gmra.mrb[0].mxu0 %v887
      %v1085 = vpop.f32.mrb[0].mxu0
      %v1086 = vadd.f32 %v913, %v1085
      %v1087 = vpop.f32.mrb[0].mxu0
      %v1088 = vpop.f32.mrb[0].mxu0
      %v1089 = vadd.f32 %v913, %v1088
      %v1090 = vpop.f32.mrb[0].mxu0
      %1091 = vmatprep.mubr.bf16.mxu0 0
      %1092 = vmatmul.mubr.bf16.gmra.mrb[0].mxu0 %v888
      %v1093 = vpop.f32.mrb[0].mxu0
      %v1094 = vadd.f32 %v913, %v1093
      %v1095 = vpop.f32.mrb[0].mxu0
      %v1096 = vpop.f32.mrb[0].mxu0
      %v1097 = vadd.f32 %v913, %v1096
      %v1098 = vpop.f32.mrb[0].mxu0
      %1099 = vmatprep.mubr.bf16.mxu0 0
      %1100 = vmatmul.mubr.bf16.gmra.mrb[0].mxu0 %v889
      %v1101 = vpop.f32.mrb[0].mxu0
      %v1102 = vadd.f32 %v913, %v1101
      %v1103 = vpop.f32.mrb[0].mxu0
      %v1104 = vpop.f32.mrb[0].mxu0
      %v1105 = vadd.f32 %v913, %v1104
      %v1106 = vpop.f32.mrb[0].mxu0
      %1107 = vmatprep.mubr.bf16.mxu0 0
      %1108 = vmatmul.mubr.bf16.gmra.mrb[0].mxu0 %v890
      %v1109 = vpop.f32.mrb[0].mxu0
      %v1110 = vadd.f32 %v913, %v1109
      %v1111 = vpop.f32.mrb[0].mxu0
      %v1112 = vpop.f32.mrb[0].mxu0
      %v1113 = vadd.f32 %v913, %v1112
      %v1114 = vpop.f32.mrb[0].mxu0
      %1115 = vmatprep.mubr.bf16.mxu0 0
      %1116 = vmatmul.mubr.bf16.gmra.mrb[0].mxu0 %v891
      %v1117 = vpop.f32.mrb[0].mxu0
      %v1118 = vadd.f32 %v913, %v1117
      %v1119 = vpop.f32.mrb[0].mxu0
      %v1120 = vpop.f32.mrb[0].mxu0
      %v1121 = vadd.f32 %v913, %v1120
      %v1122 = vpop.f32.mrb[0].mxu0
      %1123 = vdwg.mxu0
      %vm1124 = vcmask 130048
      %v1125 = vsel %vm1124, %v998, -inf
      %1126 = vmax.xlane.f32.xlu0 %v1125
      %v1127 = vpop.xlane.xlu0 %1126
      %v1128 = vsel %vm1124, %v1001, -inf
      %1129 = vmax.xlane.f32.xlu0 %v1128
      %v1130 = vpop.xlane.xlu0 %1129
      %v1131 = vsel %vm1124, %v1006, -inf
      %1132 = vmax.xlane.f32.xlu0 %v1131
      %v1133 = vpop.xlane.xlu0 %1132
      %v1134 = vsel %vm1124, %v1009, -inf
      %1135 = vmax.xlane.f32.xlu0 %v1134
      %v1136 = vpop.xlane.xlu0 %1135
      %v1137 = vsel %vm1124, %v1014, -inf
      %1138 = vmax.xlane.f32.xlu0 %v1137
      %v1139 = vpop.xlane.xlu0 %1138
      %v1140 = vsel %vm1124, %v1017, -inf
      %1141 = vmax.xlane.f32.xlu0 %v1140
      %v1142 = vpop.xlane.xlu0 %1141
      %v1143 = vsel %vm1124, %v1022, -inf
      %1144 = vmax.xlane.f32.xlu0 %v1143
      %v1145 = vpop.xlane.xlu0 %1144
      %v1146 = vsel %vm1124, %v1025, -inf
      %1147 = vmax.xlane.f32.xlu0 %v1146
      %v1148 = vpop.xlane.xlu0 %1147
      %v1149 = vsel %vm1124, %v1030, -inf
      %1150 = vmax.xlane.f32.xlu0 %v1149
      %v1151 = vpop.xlane.xlu0 %1150
      %v1152 = vsel %vm1124, %v1033, -inf
      %1153 = vmax.xlane.f32.xlu0 %v1152
      %v1154 = vpop.xlane.xlu0 %1153
      %v1155 = vsel %vm1124, %v1038, -inf
      %1156 = vmax.xlane.f32.xlu0 %v1155
      %v1157 = vpop.xlane.xlu0 %1156
      %v1158 = vsel %vm1124, %v1041, -inf
      %1159 = vmax.xlane.f32.xlu0 %v1158
      %v1160 = vpop.xlane.xlu0 %1159
      %v1161 = vsel %vm1124, %v1046, -inf
      %1162 = vmax.xlane.f32.xlu0 %v1161
      %v1163 = vpop.xlane.xlu0 %1162
      %v1164 = vsel %vm1124, %v1049, -inf
      %1165 = vmax.xlane.f32.xlu0 %v1164
      %v1166 = vpop.xlane.xlu0 %1165
      %v1167 = vsel %vm1124, %v1054, -inf
      %1168 = vmax.xlane.f32.xlu0 %v1167
      %v1169 = vpop.xlane.xlu0 %1168
      %v1170 = vsel %vm1124, %v1057, -inf
      %1171 = vmax.xlane.f32.xlu0 %v1170
      %v1172 = vpop.xlane.xlu0 %1171
      %v1173 = vsel %vm1124, %v1062, -inf
      %1174 = vmax.xlane.f32.xlu0 %v1173
      %v1175 = vpop.xlane.xlu0 %1174
      %v1176 = vsel %vm1124, %v1065, -inf
      %1177 = vmax.xlane.f32.xlu0 %v1176
      %v1178 = vpop.xlane.xlu0 %1177
      %v1179 = vsel %vm1124, %v1070, -inf
      %1180 = vmax.xlane.f32.xlu0 %v1179
      %v1181 = vpop.xlane.xlu0 %1180
      %v1182 = vsel %vm1124, %v1073, -inf
      %1183 = vmax.xlane.f32.xlu0 %v1182
      %v1184 = vpop.xlane.xlu0 %1183
      %v1185 = vsel %vm1124, %v1078, -inf
      %1186 = vmax.xlane.f32.xlu0 %v1185
      %v1187 = vpop.xlane.xlu0 %1186
      %v1188 = vsel %vm1124, %v1081, -inf
      %1189 = vmax.xlane.f32.xlu0 %v1188
      %v1190 = vpop.xlane.xlu0 %1189
      %v1191 = vsel %vm1124, %v1086, -inf
      %1192 = vmax.xlane.f32.xlu0 %v1191
      %v1193 = vpop.xlane.xlu0 %1192
      %v1194 = vsel %vm1124, %v1089, -inf
      %1195 = vmax.xlane.f32.xlu0 %v1194
      %v1196 = vpop.xlane.xlu0 %1195
      %v1197 = vsel %vm1124, %v1094, -inf
      %1198 = vmax.xlane.f32.xlu0 %v1197
      %v1199 = vpop.xlane.xlu0 %1198
      %v1200 = vsel %vm1124, %v1097, -inf
      %1201 = vmax.xlane.f32.xlu0 %v1200
      %v1202 = vpop.xlane.xlu0 %1201
      %v1203 = vsel %vm1124, %v1102, -inf
      %1204 = vmax.xlane.f32.xlu0 %v1203
      %v1205 = vpop.xlane.xlu0 %1204
      %v1206 = vsel %vm1124, %v1105, -inf
      %1207 = vmax.xlane.f32.xlu0 %v1206
      %v1208 = vpop.xlane.xlu0 %1207
      %v1209 = vsel %vm1124, %v1110, -inf
      %1210 = vmax.xlane.f32.xlu0 %v1209
      %v1211 = vpop.xlane.xlu0 %1210
      %v1212 = vsel %vm1124, %v1113, -inf
      %1213 = vmax.xlane.f32.xlu0 %v1212
      %v1214 = vpop.xlane.xlu0 %1213
      %v1215 = vsel %vm1124, %v1118, -inf
      %1216 = vmax.xlane.f32.xlu0 %v1215
      %v1217 = vpop.xlane.xlu0 %1216
      %v1218 = vsel %vm1124, %v1121, -inf
      %1219 = vmax.xlane.f32.xlu0 %v1218
      %v1220 = vpop.xlane.xlu0 %1219
      %v1221 = vsub.f32 %v998, %v1127
      %v1222 = vsub.f32 %v1001, %v1130
      %v1223 = vsub.f32 %v1006, %v1133
      %v1224 = vsub.f32 %v1009, %v1136
      %v1225 = vsub.f32 %v1014, %v1139
      %v1226 = vsub.f32 %v1017, %v1142
      %v1227 = vsub.f32 %v1022, %v1145
      %v1228 = vsub.f32 %v1025, %v1148
      %v1229 = vsub.f32 %v1030, %v1151
      %v1230 = vsub.f32 %v1033, %v1154
      %v1231 = vsub.f32 %v1038, %v1157
      %v1232 = vsub.f32 %v1041, %v1160
      %v1233 = vsub.f32 %v1046, %v1163
      %v1234 = vsub.f32 %v1049, %v1166
      %v1235 = vsub.f32 %v1054, %v1169
      %v1236 = vsub.f32 %v1057, %v1172
      %v1237 = vsub.f32 %v1062, %v1175
      %v1238 = vsub.f32 %v1065, %v1178
      %v1239 = vsub.f32 %v1070, %v1181
      %v1240 = vsub.f32 %v1073, %v1184
      %v1241 = vsub.f32 %v1078, %v1187
      %v1242 = vsub.f32 %v1081, %v1190
      %v1243 = vsub.f32 %v1086, %v1193
      %v1244 = vsub.f32 %v1089, %v1196
      %v1245 = vsub.f32 %v1094, %v1199
      %v1246 = vsub.f32 %v1097, %v1202
      %v1247 = vsub.f32 %v1102, %v1205
      %v1248 = vsub.f32 %v1105, %v1208
      %v1249 = vsub.f32 %v1110, %v1211
      %v1250 = vsub.f32 %v1113, %v1214
      %v1251 = vsub.f32 %v1118, %v1217
      %v1252 = vsub.f32 %v1121, %v1220
      %v1253 = vmul.f32 %v1221, 1.442695
      %v1254 = vpow.pop %v1253
      %v1255 = vmul.f32 %v1222, 1.442695
      %v1256 = vpow.pop %v1255
      %v1257 = vmul.f32 %v1223, 1.442695
      %v1258 = vpow.pop %v1257
      %v1259 = vmul.f32 %v1224, 1.442695
      %v1260 = vpow.pop %v1259
      %v1261 = vmul.f32 %v1225, 1.442695
      %v1262 = vpow.pop %v1261
      %v1263 = vmul.f32 %v1226, 1.442695
      %v1264 = vpow.pop %v1263
      %v1265 = vmul.f32 %v1227, 1.442695
      %v1266 = vpow.pop %v1265
      %v1267 = vmul.f32 %v1228, 1.442695
      %v1268 = vpow.pop %v1267
      %v1269 = vmul.f32 %v1229, 1.442695
      %v1270 = vpow.pop %v1269
      %v1271 = vmul.f32 %v1230, 1.442695
      %v1272 = vpow.pop %v1271
      %v1273 = vmul.f32 %v1231, 1.442695
      %v1274 = vpow.pop %v1273
      %v1275 = vmul.f32 %v1232, 1.442695
      %v1276 = vpow.pop %v1275
      %v1277 = vmul.f32 %v1233, 1.442695
      %v1278 = vpow.pop %v1277
      %v1279 = vmul.f32 %v1234, 1.442695
      %v1280 = vpow.pop %v1279
      %v1281 = vmul.f32 %v1235, 1.442695
      %v1282 = vpow.pop %v1281
      %v1283 = vmul.f32 %v1236, 1.442695
      %v1284 = vpow.pop %v1283
      %v1285 = vmul.f32 %v1237, 1.442695
      %v1286 = vpow.pop %v1285
      %v1287 = vmul.f32 %v1238, 1.442695
      %v1288 = vpow.pop %v1287
      %v1289 = vmul.f32 %v1239, 1.442695
      %v1290 = vpow.pop %v1289
      %v1291 = vmul.f32 %v1240, 1.442695
      %v1292 = vpow.pop %v1291
      %v1293 = vmul.f32 %v1241, 1.442695
      %v1294 = vpow.pop %v1293
      %v1295 = vmul.f32 %v1242, 1.442695
      %v1296 = vpow.pop %v1295
      %v1297 = vmul.f32 %v1243, 1.442695
      %v1298 = vpow.pop %v1297
      %v1299 = vmul.f32 %v1244, 1.442695
      %v1300 = vpow.pop %v1299
      %v1301 = vmul.f32 %v1245, 1.442695
      %v1302 = vpow.pop %v1301
      %v1303 = vmul.f32 %v1246, 1.442695
      %v1304 = vpow.pop %v1303
      %v1305 = vmul.f32 %v1247, 1.442695
      %v1306 = vpow.pop %v1305
      %v1307 = vmul.f32 %v1248, 1.442695
      %v1308 = vpow.pop %v1307
      %v1309 = vmul.f32 %v1249, 1.442695
      %v1310 = vpow.pop %v1309
      %v1311 = vmul.f32 %v1250, 1.442695
      %v1312 = vpow.pop %v1311
      %v1313 = vmul.f32 %v1251, 1.442695
      %v1314 = vpow.pop %v1313
      %v1315 = vmul.f32 %v1252, 1.442695
      %v1316 = vpow.pop %v1315
      %v1317 = vsel %vm1124, %v1254, 0.0
      %1318 = vadd.xlane.f32.xlu0 %v1317
      %v1319 = vpop.xlane.xlu0 %1318
      %v1320 = vsel %vm1124, %v1256, 0.0
      %1321 = vadd.xlane.f32.xlu0 %v1320
      %v1322 = vpop.xlane.xlu0 %1321
      %v1323 = vsel %vm1124, %v1258, 0.0
      %1324 = vadd.xlane.f32.xlu0 %v1323
      %v1325 = vpop.xlane.xlu0 %1324
      %v1326 = vsel %vm1124, %v1260, 0.0
      %1327 = vadd.xlane.f32.xlu0 %v1326
      %v1328 = vpop.xlane.xlu0 %1327
      %v1329 = vsel %vm1124, %v1262, 0.0
      %1330 = vadd.xlane.f32.xlu0 %v1329
      %v1331 = vpop.xlane.xlu0 %1330
      %v1332 = vsel %vm1124, %v1264, 0.0
      %1333 = vadd.xlane.f32.xlu0 %v1332
      %v1334 = vpop.xlane.xlu0 %1333
      %v1335 = vsel %vm1124, %v1266, 0.0
      %1336 = vadd.xlane.f32.xlu0 %v1335
      %v1337 = vpop.xlane.xlu0 %1336
      %v1338 = vsel %vm1124, %v1268, 0.0
      %1339 = vadd.xlane.f32.xlu0 %v1338
      %v1340 = vpop.xlane.xlu0 %1339
      %v1341 = vsel %vm1124, %v1270, 0.0
      %1342 = vadd.xlane.f32.xlu0 %v1341
      %v1343 = vpop.xlane.xlu0 %1342
      %v1344 = vsel %vm1124, %v1272, 0.0
      %1345 = vadd.xlane.f32.xlu0 %v1344
      %v1346 = vpop.xlane.xlu0 %1345
      %v1347 = vsel %vm1124, %v1274, 0.0
      %1348 = vadd.xlane.f32.xlu0 %v1347
      %v1349 = vpop.xlane.xlu0 %1348
      %v1350 = vsel %vm1124, %v1276, 0.0
      %1351 = vadd.xlane.f32.xlu0 %v1350
      %v1352 = vpop.xlane.xlu0 %1351
      %v1353 = vsel %vm1124, %v1278, 0.0
      %1354 = vadd.xlane.f32.xlu0 %v1353
      %v1355 = vpop.xlane.xlu0 %1354
      %v1356 = vsel %vm1124, %v1280, 0.0
      %1357 = vadd.xlane.f32.xlu0 %v1356
      %v1358 = vpop.xlane.xlu0 %1357
      %v1359 = vsel %vm1124, %v1282, 0.0
      %1360 = vadd.xlane.f32.xlu0 %v1359
      %v1361 = vpop.xlane.xlu0 %1360
      %v1362 = vsel %vm1124, %v1284, 0.0
      %1363 = vadd.xlane.f32.xlu0 %v1362
      %v1364 = vpop.xlane.xlu0 %1363
      %v1365 = vsel %vm1124, %v1286, 0.0
      %1366 = vadd.xlane.f32.xlu0 %v1365
      %v1367 = vpop.xlane.xlu0 %1366
      %v1368 = vsel %vm1124, %v1288, 0.0
      %1369 = vadd.xlane.f32.xlu0 %v1368
      %v1370 = vpop.xlane.xlu0 %1369
      %v1371 = vsel %vm1124, %v1290, 0.0
      %1372 = vadd.xlane.f32.xlu0 %v1371
      %v1373 = vpop.xlane.xlu0 %1372
      %v1374 = vsel %vm1124, %v1292, 0.0
      %1375 = vadd.xlane.f32.xlu0 %v1374
      %v1376 = vpop.xlane.xlu0 %1375
      %v1377 = vsel %vm1124, %v1294, 0.0
      %1378 = vadd.xlane.f32.xlu0 %v1377
      %v1379 = vpop.xlane.xlu0 %1378
      %v1380 = vsel %vm1124, %v1296, 0.0
      %1381 = vadd.xlane.f32.xlu0 %v1380
      %v1382 = vpop.xlane.xlu0 %1381
      %v1383 = vsel %vm1124, %v1298, 0.0
      %1384 = vadd.xlane.f32.xlu0 %v1383
      %v1385 = vpop.xlane.xlu0 %1384
      %v1386 = vsel %vm1124, %v1300, 0.0
      %1387 = vadd.xlane.f32.xlu0 %v1386
      %v1388 = vpop.xlane.xlu0 %1387
      %v1389 = vsel %vm1124, %v1302, 0.0
      %1390 = vadd.xlane.f32.xlu0 %v1389
      %v1391 = vpop.xlane.xlu0 %1390
      %v1392 = vsel %vm1124, %v1304, 0.0
      %1393 = vadd.xlane.f32.xlu0 %v1392
      %v1394 = vpop.xlane.xlu0 %1393
      %v1395 = vsel %vm1124, %v1306, 0.0
      %1396 = vadd.xlane.f32.xlu0 %v1395
      %v1397 = vpop.xlane.xlu0 %1396
      %v1398 = vsel %vm1124, %v1308, 0.0
      %1399 = vadd.xlane.f32.xlu0 %v1398
      %v1400 = vpop.xlane.xlu0 %1399
      %v1401 = vsel %vm1124, %v1310, 0.0
      %1402 = vadd.xlane.f32.xlu0 %v1401
      %v1403 = vpop.xlane.xlu0 %1402
      %v1404 = vsel %vm1124, %v1312, 0.0
      %1405 = vadd.xlane.f32.xlu0 %v1404
      %v1406 = vpop.xlane.xlu0 %1405
      %v1407 = vsel %vm1124, %v1314, 0.0
      %1408 = vadd.xlane.f32.xlu0 %v1407
      %v1409 = vpop.xlane.xlu0 %1408
      %v1410 = vsel %vm1124, %v1316, 0.0
      %1411 = vadd.xlane.f32.xlu0 %v1410
      %v1412 = vpop.xlane.xlu0 %1411
      %v1413 = vrcp.pop %v1319
      %v1414 = vmul.f32 %v1254, %v1413
      %v1415 = vrcp.pop %v1322
      %v1416 = vmul.f32 %v1256, %v1415
      %v1417 = vrcp.pop %v1325
      %v1418 = vmul.f32 %v1258, %v1417
      %v1419 = vrcp.pop %v1328
      %v1420 = vmul.f32 %v1260, %v1419
      %v1421 = vrcp.pop %v1331
      %v1422 = vmul.f32 %v1262, %v1421
      %v1423 = vrcp.pop %v1334
      %v1424 = vmul.f32 %v1264, %v1423
      %v1425 = vrcp.pop %v1337
      %v1426 = vmul.f32 %v1266, %v1425
      %v1427 = vrcp.pop %v1340
      %v1428 = vmul.f32 %v1268, %v1427
      %v1429 = vrcp.pop %v1343
      %v1430 = vmul.f32 %v1270, %v1429
      %v1431 = vrcp.pop %v1346
      %v1432 = vmul.f32 %v1272, %v1431
      %v1433 = vrcp.pop %v1349
      %v1434 = vmul.f32 %v1274, %v1433
      %v1435 = vrcp.pop %v1352
      %v1436 = vmul.f32 %v1276, %v1435
      %v1437 = vrcp.pop %v1355
      %v1438 = vmul.f32 %v1278, %v1437
      %v1439 = vrcp.pop %v1358
      %v1440 = vmul.f32 %v1280, %v1439
      %v1441 = vrcp.pop %v1361
      %v1442 = vmul.f32 %v1282, %v1441
      %v1443 = vrcp.pop %v1364
      %v1444 = vmul.f32 %v1284, %v1443
      %v1445 = vrcp.pop %v1367
      %v1446 = vmul.f32 %v1286, %v1445
      %v1447 = vrcp.pop %v1370
      %v1448 = vmul.f32 %v1288, %v1447
      %v1449 = vrcp.pop %v1373
      %v1450 = vmul.f32 %v1290, %v1449
      %v1451 = vrcp.pop %v1376
      %v1452 = vmul.f32 %v1292, %v1451
      %v1453 = vrcp.pop %v1379
      %v1454 = vmul.f32 %v1294, %v1453
      %v1455 = vrcp.pop %v1382
      %v1456 = vmul.f32 %v1296, %v1455
      %v1457 = vrcp.pop %v1385
      %v1458 = vmul.f32 %v1298, %v1457
      %v1459 = vrcp.pop %v1388
      %v1460 = vmul.f32 %v1300, %v1459
      %v1461 = vrcp.pop %v1391
      %v1462 = vmul.f32 %v1302, %v1461
      %v1463 = vrcp.pop %v1394
      %v1464 = vmul.f32 %v1304, %v1463
      %v1465 = vrcp.pop %v1397
      %v1466 = vmul.f32 %v1306, %v1465
      %v1467 = vrcp.pop %v1400
      %v1468 = vmul.f32 %v1308, %v1467
      %v1469 = vrcp.pop %v1403
      %v1470 = vmul.f32 %v1310, %v1469
      %v1471 = vrcp.pop %v1406
      %v1472 = vmul.f32 %v1312, %v1471
      %v1473 = vrcp.pop %v1409
      %v1474 = vmul.f32 %v1314, %v1473
      %v1475 = vrcp.pop %v1412
      %v1476 = vmul.f32 %v1316, %v1475
      %1477 = vst.msk [vmem:[%s280] sm:$0xff] %vm1124, %v1414
      %1478 = vst.msk [vmem:[%s280 + $0x8] sm:$0xff] %vm1124, %v1416
      %1479 = vst.msk [vmem:[%s280 + $0x10] sm:$0xff] %vm1124, %v1418
      %1480 = vst.msk [vmem:[%s280 + $0x18] sm:$0xff] %vm1124, %v1420
      %1481 = vst.msk [vmem:[%s280 + $0x20] sm:$0xff] %vm1124, %v1422
      %1482 = vst.msk [vmem:[%s280 + $0x28] sm:$0xff] %vm1124, %v1424
      %1483 = vst.msk [vmem:[%s280 + $0x30] sm:$0xff] %vm1124, %v1426
      %1484 = vst.msk [vmem:[%s280 + $0x38] sm:$0xff] %vm1124, %v1428
      %1485 = vst.msk [vmem:[%s280 + $0x40] sm:$0xff] %vm1124, %v1430
      %1486 = vst.msk [vmem:[%s280 + $0x48] sm:$0xff] %vm1124, %v1432
      %1487 = vst.msk [vmem:[%s280 + $0x50] sm:$0xff] %vm1124, %v1434
      %1488 = vst.msk [vmem:[%s280 + $0x58] sm:$0xff] %vm1124, %v1436
      %1489 = vst.msk [vmem:[%s280 + $0x60] sm:$0xff] %vm1124, %v1438
      %1490 = vst.msk [vmem:[%s280 + $0x68] sm:$0xff] %vm1124, %v1440
      %1491 = vst.msk [vmem:[%s280 + $0x70] sm:$0xff] %vm1124, %v1442
      %1492 = vst.msk [vmem:[%s280 + $0x78] sm:$0xff] %vm1124, %v1444
      %1493 = vst.msk [vmem:[%s280 + $0x80] sm:$0xff] %vm1124, %v1446
      %1494 = vst.msk [vmem:[%s280 + $0x88] sm:$0xff] %vm1124, %v1448
      %1495 = vst.msk [vmem:[%s280 + $0x90] sm:$0xff] %vm1124, %v1450
      %1496 = vst.msk [vmem:[%s280 + $0x98] sm:$0xff] %vm1124, %v1452
      %1497 = vst.msk [vmem:[%s280 + $0xa0] sm:$0xff] %vm1124, %v1454
      %1498 = vst.msk [vmem:[%s280 + $0xa8] sm:$0xff] %vm1124, %v1456
      %1499 = vst.msk [vmem:[%s280 + $0xb0] sm:$0xff] %vm1124, %v1458
      %1500 = vst.msk [vmem:[%s280 + $0xb8] sm:$0xff] %vm1124, %v1460
      %1501 = vst.msk [vmem:[%s280 + $0xc0] sm:$0xff] %vm1124, %v1462
      %1502 = vst.msk [vmem:[%s280 + $0xc8] sm:$0xff] %vm1124, %v1464
      %1503 = vst.msk [vmem:[%s280 + $0xd0] sm:$0xff] %vm1124, %v1466
      %1504 = vst.msk [vmem:[%s280 + $0xd8] sm:$0xff] %vm1124, %v1468
      %1505 = vst.msk [vmem:[%s280 + $0xe0] sm:$0xff] %vm1124, %v1470
      %1506 = vst.msk [vmem:[%s280 + $0xe8] sm:$0xff] %vm1124, %v1472
      %1507 = vst.msk [vmem:[%s280 + $0xf0] sm:$0xff] %vm1124, %v1474
      %1508 = vst.msk [vmem:[%s280 + $0xf8] sm:$0xff] %vm1124, %v1476
      %s1509 = smul.u32 32, %s18
      %p1510 = scmp.lt.s32.totalorder %s1509, 63
      %s1511 = scalar_select %p1510, %s1509, 63
      %s1512 = smul.addr %s1511, 8
      %s1513 = scalar_lea.vmem %s7, %s1512
      // Predicated region
      $region49: #{fc_model_forward.1} parent=47 // pred_check
        %p1514 = pneg %p188
      $region50: #{fc_model_forward.1} parent=47 // pred_check_branch
        %1516 = sbr.rel (%p1514) target = $region52
      $region51: #{fc_model_forward.1} parent=47 // pred_region
        %s1517 = smul.u32 32, %s18
      $region52: #{fc_model_forward.1} parent=47 // pred_fallthru
        _
    $region48: #{fc_model_forward.1} parent=5 // pred_fallthru
      _
    %p1518 = scmp.le.s32.totalorder 2, %s13
    // Predicated region
    $region53: #{fc_model_forward.1} parent=5 // pred_check
      %p1519 = pneg %p1518
    $region54: #{fc_model_forward.1} parent=5 // pred_check_branch
      %1521 = sbr.rel (%p1519) target = $region56
    $region55: #{fc_model_forward.1} parent=5 // pred_region
      %s1522 = ssub.s32 %s13, 2
      // Predicated region
      $region57: #{fc_model_forward.1} parent=55 // pred_check
        %p1523 = pneg %p194
      $region58: #{fc_model_forward.1} parent=55 // pred_check_branch
        %1525 = sbr.rel (%p1523) target = $region60
      $region59: #{fc_model_forward.1} parent=55 // pred_region
        %s1526 = smul.u32 32, %s19
        %p1527 = scmp.lt.s32.totalorder %s1526, 63
        %s1528 = scalar_select %p1527, %s1526, 63
        %s1529 = smul.addr %s1528, 8
        %s1530 = scalar_lea.vmem %s7, %s1529
      $region60: #{fc_model_forward.1} parent=55 // pred_fallthru
        _
    $region56: #{fc_model_forward.1} parent=5 // pred_fallthru
      _
  $region6: #{fc_model_forward.1} parent=0 // loop_footer
    %s17 = sadd.s32 1, %s13
  $region7: #{fc_model_forward.1} parent=0 // loop_footer_branch
    %12 = sbr.rel target = $region3
  $region8: #{fc_model_forward.1} parent=0 // loop_exit
    _

</llo_original>
